<compile_context>
chip_gen: v7x
topology: tpu7x:2x2x1
jax: 0.10.0
libtpu: 0.0.40
codegen_flags: <defaults>
</compile_context>

<pallas_src>
import jax
import jax.numpy as jnp
from jax.experimental import pallas as pl
from jax.experimental.pallas import tpu as pltpu


def _conv_bn_silu_matmul_kernel(lhs_ref, rhs_ref, bias_ref, o_ref, acc_ref):
    """One (tm, tn) output tile of SiLU(lhs @ rhs + bias), accumulated over K."""
    @pl.when(pl.program_id(2) == 0)
    def _():
        acc_ref[...] = jnp.zeros_like(acc_ref)

    acc_ref[...] += jnp.dot(
        lhs_ref[...], rhs_ref[...],
        preferred_element_type=jnp.float32,
        precision=jax.lax.Precision.HIGHEST,
    )

    @pl.when(pl.program_id(2) == pl.num_programs(2) - 1)
    def _():
        y = acc_ref[...] + bias_ref[...]                       # folded BN bias
        sig = pl.reciprocal(1.0 + jnp.exp(-y), approx=True)    # EUP exp + vrcp
        o_ref[...] = (y * sig).astype(o_ref.dtype)             # SiLU epilogue


def _round_up(x, m):
    return (x + m - 1) // m * m


def _balanced_tile(dim, max_tile, align):
    """Pick (tile, padded_dim) with tile % align == 0 and padded_dim % tile == 0."""
    dim_a = _round_up(max(dim, 1), align)
    num = pl.cdiv(dim_a, max_tile)
    tile = _round_up(pl.cdiv(dim_a, num), align)
    return tile, num * tile


def conv_bn_silu_forward(x, weight, gamma, beta, running_mean, running_var,
                         *, stride=1, padding=1, groups=1, eps=1e-5,
                         save_copy=None, tm=256, tn=256, tk=512):
    """Pallas TPU implementation of Conv.forward (Conv2d -> BN(eval) -> SiLU)."""
    assert groups == 1  # TODO(synk): grouped convolution (g > 1) not implemented
    n, c1, h, w = x.shape
    c2, c1_w, kh, kw = weight.shape
    assert c1_w == c1

    # ---- fold BatchNorm (inference, running stats) into conv weight + bias --
    # TODO(synk): PyTorch training-mode BN uses batch statistics; eval-mode only.
    scale = gamma * jax.lax.rsqrt(running_var + eps)            # (c2,)
    w_folded = weight * scale[:, None, None, None]              # (c2, c1, kh, kw)
    bias = beta - running_mean * scale                          # (c2,)

    # ---- im2col (layout plumbing outside the kernel) ------------------------
    ho = (h + 2 * padding - kh) // stride + 1
    wo = (w + 2 * padding - kw) // stride + 1
    x_nhwc = jnp.transpose(x, (0, 2, 3, 1))                     # (n, h, w, c1)
    x_pad = jnp.pad(x_nhwc, ((0, 0), (padding, padding), (padding, padding), (0, 0)))
    cols = []
    for ih in range(kh):
        for iw in range(kw):
            cols.append(x_pad[:, ih: ih + (ho - 1) * stride + 1: stride,
                                 iw: iw + (wo - 1) * stride + 1: stride, :])
    lhs = jnp.concatenate(cols, axis=-1).reshape(n * ho * wo, kh * kw * c1)
    rhs = jnp.transpose(w_folded, (2, 3, 1, 0)).reshape(kh * kw * c1, c2)

    # ---- pad to lane/sublane-dense, MXU-friendly shapes ----------------------
    m, k = lhs.shape
    tm_eff, m_pad = _balanced_tile(m, tm, 8)
    tk_eff, k_pad = _balanced_tile(k, tk, 128)
    tn_eff, n_pad = _balanced_tile(c2, tn, 128)

    lhs_p = jnp.pad(lhs, ((0, m_pad - m), (0, k_pad - k)))
    rhs_p = jnp.pad(rhs, ((0, k_pad - k), (0, n_pad - c2)))
    bias_p = jnp.pad(bias, (0, n_pad - c2)).reshape(1, n_pad)

    grid = (m_pad // tm_eff, n_pad // tn_eff, k_pad // tk_eff)

    cost = pl.CostEstimate(
        flops=2 * m_pad * n_pad * k_pad,
        transcendentals=m_pad * n_pad,
        bytes_accessed=4 * (m_pad * k_pad + k_pad * n_pad + m_pad * n_pad),
    )

    out_p = pl.pallas_call(
        _conv_bn_silu_matmul_kernel,
        out_shape=jax.ShapeDtypeStruct((m_pad, n_pad), x.dtype),
        grid=grid,
        in_specs=[
            pl.BlockSpec((tm_eff, tk_eff), lambda i, j, kk: (i, kk)),   # im2col lhs
            pl.BlockSpec((tk_eff, tn_eff), lambda i, j, kk: (kk, j)),   # folded weights
            pl.BlockSpec((1, tn_eff), lambda i, j, kk: (0, j)),         # folded BN bias
        ],
        out_specs=pl.BlockSpec((tm_eff, tn_eff), lambda i, j, kk: (i, j)),
        scratch_shapes=[pltpu.VMEM((tm_eff, tn_eff), jnp.float32)],
        compiler_params=pltpu.CompilerParams(
            dimension_semantics=("parallel", "parallel", "arbitrary")),
        cost_estimate=cost,
    )(lhs_p, rhs_p, bias_p)

    out = out_p[:m, :c2].reshape(n, ho, wo, c2)
    out = jnp.transpose(out, (0, 3, 1, 2))                      # back to NCHW

    if save_copy is not None:
        save_copy.append(out)                                   # PyTorch's save_copy hook
    return out


if __name__ == "__main__":
    key = jax.random.PRNGKey(0)
    k0, k1, k2, k3, k4, k5 = jax.random.split(key, 6)

    N, C1, H, W = 2, 4, 16, 16
    C2, K, S, P = 8, 3, 1, 1          # Conv(c1=4, c2=8, k=3, s=1, p=1, g=1)
    EPS = 1e-5

    x = jax.random.normal(k0, (N, C1, H, W), dtype=jnp.float32)
    weight = jax.random.normal(k1, (C2, C1, K, K), dtype=jnp.float32) * 0.1
    gamma = 1.0 + 0.1 * jax.random.normal(k2, (C2,), dtype=jnp.float32)
    beta = 0.1 * jax.random.normal(k3, (C2,), dtype=jnp.float32)
    running_mean = 0.1 * jax.random.normal(k4, (C2,), dtype=jnp.float32)
    running_var = jax.random.uniform(k5, (C2,), dtype=jnp.float32,
                                     minval=0.5, maxval=1.5)

    saved = []
    out = conv_bn_silu_forward(x, weight, gamma, beta, running_mean, running_var,
                               stride=S, padding=P, groups=1, eps=EPS,
                               save_copy=saved)
    out = jax.block_until_ready(out)

    # Reference: Conv2d(bias=False) -> BatchNorm2d(eval) -> SiLU.
    conv_ref = jax.lax.conv_general_dilated(
        x, weight, window_strides=(S, S), padding=((P, P), (P, P)),
        dimension_numbers=("NCHW", "OIHW", "NCHW"),
        precision=jax.lax.Precision.HIGHEST)
    scale_ref = gamma / jnp.sqrt(running_var + EPS)
    bn_ref = (conv_ref * scale_ref[None, :, None, None]
              + (beta - running_mean * scale_ref)[None, :, None, None])
    ref = bn_ref * jax.nn.sigmoid(bn_ref)

    assert out.shape == ref.shape == (N, C2, H, W)
    assert out.dtype == x.dtype
    assert len(saved) == 1
    max_err = float(jnp.max(jnp.abs(out - ref)))
    assert jnp.allclose(out, ref, atol=2e-3, rtol=2e-3), f"max_err={max_err}"

    print("KERNEL_OK")
</pallas_src>

<mosaic_0001>
module attributes {stable_mosaic.version = 11 : i64} {
  func.func @_conv_bn_silu_matmul_kernel(%arg0: i32, %arg1: i32, %arg2: i32, %arg3: memref<256x128xf32, #tpu.memory_space<vmem>>, %arg4: memref<128x128xf32, #tpu.memory_space<vmem>>, %arg5: memref<1x128xf32, #tpu.memory_space<vmem>>, %arg6: memref<256x128xf32, #tpu.memory_space<vmem>>, %arg7: memref<256x128xf32, #tpu.memory_space<vmem>>) attributes {dimension_semantics = [#tpu.dimension_semantics<parallel>, #tpu.dimension_semantics<parallel>, #tpu.dimension_semantics<arbitrary>], iteration_bounds = array<i64: 2, 1, 1>, scalar_prefetch = 0 : i64, scratch_operands = 1 : i64, tpu.core_type = #tpu.core_type<tc>, window_params = [{transform_indices = @transform_0, window_bounds = array<i64: 256, 128>}, {transform_indices = @transform_1, window_bounds = array<i64: 128, 128>}, {transform_indices = @transform_2, window_bounds = array<i64: 1, 128>}, {transform_indices = @transform_3, window_bounds = array<i64: 256, 128>}]} {
    %c0_i32 = arith.constant 0 : i32
    %0 = arith.cmpi eq, %arg2, %c0_i32 : i32
    %1 = arith.extui %0 : i1 to i32
    %c0_i32_0 = arith.constant 0 : i32
    %2 = arith.cmpi ne, %1, %c0_i32_0 : i32
    scf.if %2 {
      %cst_10 = arith.constant 0.000000e+00 : f32
      %12 = vector.broadcast %cst_10 : f32 to vector<256x128xf32>
      %c0_11 = arith.constant 0 : index
      %c0_12 = arith.constant 0 : index
      %13 = vector.load %arg7[%c0_11, %c0_12] : memref<256x128xf32, #tpu.memory_space<vmem>>, vector<256x128xf32>
      tpu.vector_store %arg7[%c0_11, %c0_12], %12 {strides = array<i32>} : memref<256x128xf32, #tpu.memory_space<vmem>>, vector<256x128xf32>,
    } else {
    }
    %c0 = arith.constant 0 : index
    %c0_1 = arith.constant 0 : index
    %3 = vector.load %arg7[%c0, %c0_1] : memref<256x128xf32, #tpu.memory_space<vmem>>, vector<256x128xf32>
    %c0_2 = arith.constant 0 : index
    %c0_3 = arith.constant 0 : index
    %4 = vector.load %arg3[%c0_2, %c0_3] : memref<256x128xf32, #tpu.memory_space<vmem>>, vector<256x128xf32>
    %c0_4 = arith.constant 0 : index
    %c0_5 = arith.constant 0 : index
    %5 = vector.load %arg4[%c0_4, %c0_5] : memref<128x128xf32, #tpu.memory_space<vmem>>, vector<128x128xf32>
    %cst = arith.constant dense<0.000000e+00> : vector<256x128xf32>
    %6 = tpu.matmul %4, %5, %cst {dimension_numbers = #tpu.dot_dimension_numbers<[1], [0], [0], [1], [0, 0, 1, 1], [], []>, precision = #tpu.contract_precision<fp32>} : vector<256x128xf32>, vector<128x128xf32>, vector<256x128xf32> -> vector<256x128xf32>
    %7 = arith.addf %3, %6 : vector<256x128xf32>
    %c0_6 = arith.constant 0 : index
    %c0_7 = arith.constant 0 : index
    %8 = vector.load %arg7[%c0_6, %c0_7] : memref<256x128xf32, #tpu.memory_space<vmem>>, vector<256x128xf32>
    tpu.vector_store %arg7[%c0_6, %c0_7], %7 {strides = array<i32>} : memref<256x128xf32, #tpu.memory_space<vmem>>, vector<256x128xf32>,
    %c0_i32_8 = arith.constant 0 : i32
    %9 = arith.cmpi eq, %arg2, %c0_i32_8 : i32
    %10 = arith.extui %9 : i1 to i32
    %c0_i32_9 = arith.constant 0 : i32
    %11 = arith.cmpi ne, %10, %c0_i32_9 : i32
    scf.if %11 {
      %c0_10 = arith.constant 0 : index
      %c0_11 = arith.constant 0 : index
      %12 = vector.load %arg7[%c0_10, %c0_11] : memref<256x128xf32, #tpu.memory_space<vmem>>, vector<256x128xf32>
      %c0_12 = arith.constant 0 : index
      %c0_13 = arith.constant 0 : index
      %13 = vector.load %arg5[%c0_12, %c0_13] : memref<1x128xf32, #tpu.memory_space<vmem>>, vector<1x128xf32>
      %14 = vector.broadcast %13 : vector<1x128xf32> to vector<256x128xf32>
      %15 = arith.addf %12, %14 : vector<256x128xf32>
      %cst_14 = arith.constant 0.000000e+00 : f32
      %16 = vector.broadcast %cst_14 : f32 to vector<256x128xf32>
      %17 = arith.subf %16, %15 : vector<256x128xf32>
      %18 = math.exp %17 : vector<256x128xf32>
      %cst_15 = arith.constant 1.000000e+00 : f32
      %19 = vector.broadcast %cst_15 : f32 to vector<256x128xf32>
      %20 = arith.addf %19, %18 : vector<256x128xf32>
      %21 = tpu.reciprocal %20 {approx = true} : vector<256x128xf32> -> vector<256x128xf32>
      %22 = arith.mulf %15, %21 : vector<256x128xf32>
      %c0_16 = arith.constant 0 : index
      %c0_17 = arith.constant 0 : index
      %23 = vector.load %arg6[%c0_16, %c0_17] : memref<256x128xf32, #tpu.memory_space<vmem>>, vector<256x128xf32>
      tpu.vector_store %arg6[%c0_16, %c0_17], %22 {strides = array<i32>} : memref<256x128xf32, #tpu.memory_space<vmem>>, vector<256x128xf32>,
    } else {
    }
    return
  }
  func.func @transform_0(%arg0: i32, %arg1: i32, %arg2: i32) -> (i32, i32) {
    %c0_i32 = arith.constant 0 : i32
    return %arg0, %arg2 : i32, i32
  }
  func.func @transform_1(%arg0: i32, %arg1: i32, %arg2: i32) -> (i32, i32) {
    %c0_i32 = arith.constant 0 : i32
    return %arg2, %arg1 : i32, i32
  }
  func.func @transform_2(%arg0: i32, %arg1: i32, %arg2: i32) -> (i32, i32) {
    %c0_i32 = arith.constant 0 : i32
    %c0_i32_0 = arith.constant 0 : i32
    return %c0_i32, %arg1 : i32, i32
  }
  func.func @transform_3(%arg0: i32, %arg1: i32, %arg2: i32) -> (i32, i32) {
    %c0_i32 = arith.constant 0 : i32
    return %arg0, %arg1 : i32, i32
  }
}

</mosaic_0001>

<llo_original>
// kernel: tpu_custom_call.1
$region0: #{tpu_custom_call.1}
  #allocation0 [shape = 'u32[]', space=smem, size = 0x4, offset = 0x4, fixed_abs, tag = 'smem constant byte address 0x4 - core index']
  #allocation1 [shape = 'u32[144,128]{1,0:T(1,128)}', space=vmem, size = 0x12000, scoped, tag = 'internal scratch']
  #allocation2 [shape = 'f32[256,128]{1,0:T(8,128)}', space=vmem, size = 0x20000, scoped, tag = 'scratch operand']
  %s0 = inlined_call_operand.hbm [shape: f32[512,128], index: 0, kind: input, shape index: {}]
  %s1 = inlined_call_operand.hbm [shape: f32[128,128], index: 1, kind: input, shape index: {}]
  %s2 = inlined_call_operand.vmem [shape: f32[1,128], index: 2, kind: input, shape index: {}]
  %s3 = inlined_call_operand.hbm [shape: f32[512,128], index: 3, kind: output, shape index: {}]
  %s4 = sld [smem:[#allocation0]]
  $region61: #{tpu_custom_call.1} parent=0
    _
  %s6 = ssub.s32 1, %s4
  %s7 = scalar_select 0, %s6, %s4
  $region1: #{tpu_custom_call.1} parent=0
    #allocation3 [shape = 'u8[262144]{0}', space=vmem, size = 0x40000, scoped, tag = 'input window, operand 0']
    #allocation4 [shape = 's32[2]{0}', space=sflag, size = 0x8, scoped, tag = 'scoped memory for tpu_custom_call.1']
    #allocation5 [shape = 's32[2]{0}', space=sflag, size = 0x8, scoped, tag = 'scoped memory for tpu_custom_call.1']
    #allocation6 [shape = 'u8[65536]{0}', space=vmem, size = 0x10000, scoped, tag = 'input window, operand 1, single buffered']
    #allocation7 [shape = 's32[1]{0}', space=sflag, size = 0x4, scoped, tag = 'scoped memory for tpu_custom_call.1']
    #allocation8 [shape = 'u8[262144]{0}', space=vmem, size = 0x40000, scoped, tag = 'output window, operand 0']
    %8 = vsyncpa [#allocation4], 0
    %s9 = scalar_lea.sflag [#allocation4], 1
    %10 = vsyncpa %s9, 0
    %11 = vsyncpa [#allocation7], 0
    %12 = vsyncpa [#allocation5], 0
    %s13 = scalar_lea.sflag [#allocation5], 1
    %14 = vsyncpa %s13, 0
    loop: start=0, step=1, limit=4
    $region2: #{tpu_custom_call.1} parent=1 // loop_pre_header
      _
    $region3: #{tpu_custom_call.1} parent=1 // loop_header
      %s16 = sphi 0, %s20
      %p17 = scmp.ge.s32.totalorder %s16, 4
      %s23 = sphi 0, %s42
      %s24 = sphi 0, %s38
      %s25 = sphi 0, %s34
      %s26 = sphi 0, %s23
      %s27 = sphi 0, %s24
      %s28 = sphi 0, %s25
      %s29 = sphi 0, %s26
      %s30 = sphi 0, %s27
      %s31 = sphi 0, %s28
      %s47 = sphi 0, %s49
      %s50 = sphi 0, %s47
      %s51 = sphi 0, %s50
      %s67 = sphi 0, %s51
      %s75 = sphi 0, %s77
      %s78 = sphi 0, %s75
      %s79 = sphi 0, %s78
      %s95 = sphi 0, %s79
      %s101 = sphi 0, %s103
      %s104 = sphi 0, %s101
      %s105 = sphi 0, %s104
      %s121 = sphi 0, %s105
      %s129 = sphi 0, %s131
      %s132 = sphi 0, %s129
      %s133 = sphi 0, %s132
      %s149 = sphi 0, %s133
    $region4: #{tpu_custom_call.1} parent=1 // loop_header_branch
      %19 = sbr.rel (%p17) target = $region8
    $region5: #{tpu_custom_call.1} parent=1 // loop_body
      %s21 = ssub.s32 %s16, 1
      %s22 = ssub.s32 %s16, 2
      %s32 = sadd.s32 1, %s25
      %p33 = scmp.ge.s32.totalorder %s32, 1
      %s34 = scalar_select %p33, 0, %s32
      %s35 = sadd.s32 1, %s24
      %s36 = scalar_select %p33, %s35, %s24
      %p37 = scmp.ge.s32.totalorder %s36, 1
      %s38 = scalar_select %p37, 0, %s36
      %s39 = sadd.s32 1, %s23
      %s40 = scalar_select %p37, %s39, %s23
      %p41 = scmp.ge.s32.totalorder %s40, 2
      %s42 = scalar_select %p41, 0, %s40
      %s43 = ssub.s32 %s23, %s42
      %s44 = ssub.s32 %s25, %s34
      %s45 = sor.u32 %s43, %s44
      %p46 = scmp.eq.s32.totalorder %s45, 0
      %s48 = sadd.s32 %s47, 1
      %s49 = scalar_select %p46, %s47, %s48
      %p52 = pneg %p46
      %p53 = scmp.eq.s32.totalorder %s16, 1
      %p54 = por %p52, %p53
      %p55 = scmp.ne.s32.totalorder %s47, %s50
      %p56 = scmp.eq.s32.totalorder %s16, 0
      %p57 = por %p55, %p56
      %p58 = scmp.ne.s32.totalorder %s47, %s50
      %p59 = scmp.eq.s32.totalorder %s21, 1
      %p60 = por %p58, %p59
      %p61 = scmp.ne.s32.totalorder %s50, %s51
      %p62 = scmp.eq.s32.totalorder %s21, 0
      %p63 = por %p61, %p62
      %p64 = scmp.ne.s32.totalorder %s50, %s51
      %p65 = scmp.eq.s32.totalorder %s22, 1
      %p66 = por %p64, %p65
      %p68 = scmp.ne.s32.totalorder %s51, %s67
      %p69 = scmp.eq.s32.totalorder %s22, 0
      %p70 = por %p68, %p69
      %s71 = ssub.s32 %s25, %s34
      %s72 = ssub.s32 %s24, %s38
      %s73 = sor.u32 %s71, %s72
      %p74 = scmp.eq.s32.totalorder %s73, 0
      %s76 = sadd.s32 %s75, 1
      %s77 = scalar_select %p74, %s75, %s76
      %p80 = pneg %p74
      %p81 = scmp.eq.s32.totalorder %s16, 1
      %p82 = por %p80, %p81
      %p83 = scmp.ne.s32.totalorder %s75, %s78
      %p84 = scmp.eq.s32.totalorder %s16, 0
      %p85 = por %p83, %p84
      %p86 = scmp.ne.s32.totalorder %s75, %s78
      %p87 = scmp.eq.s32.totalorder %s21, 1
      %p88 = por %p86, %p87
      %p89 = scmp.ne.s32.totalorder %s78, %s79
      %p90 = scmp.eq.s32.totalorder %s21, 0
      %p91 = por %p89, %p90
      %p92 = scmp.ne.s32.totalorder %s78, %s79
      %p93 = scmp.eq.s32.totalorder %s22, 1
      %p94 = por %p92, %p93
      %p96 = scmp.ne.s32.totalorder %s79, %s95
      %p97 = scmp.eq.s32.totalorder %s22, 0
      %p98 = por %p96, %p97
      %s99 = ssub.s32 %s24, %s38
      %p100 = scmp.eq.s32.totalorder %s99, 0
      %s102 = sadd.s32 %s101, 1
      %s103 = scalar_select %p100, %s101, %s102
      %p106 = pneg %p100
      %p107 = scmp.eq.s32.totalorder %s16, 1
      %p108 = por %p106, %p107
      %p109 = scmp.ne.s32.totalorder %s101, %s104
      %p110 = scmp.eq.s32.totalorder %s16, 0
      %p111 = por %p109, %p110
      %p112 = scmp.ne.s32.totalorder %s101, %s104
      %p113 = scmp.eq.s32.totalorder %s21, 1
      %p114 = por %p112, %p113
      %p115 = scmp.ne.s32.totalorder %s104, %s105
      %p116 = scmp.eq.s32.totalorder %s21, 0
      %p117 = por %p115, %p116
      %p118 = scmp.ne.s32.totalorder %s104, %s105
      %p119 = scmp.eq.s32.totalorder %s22, 1
      %p120 = por %p118, %p119
      %p122 = scmp.ne.s32.totalorder %s105, %s121
      %p123 = scmp.eq.s32.totalorder %s22, 0
      %p124 = por %p122, %p123
      %s125 = ssub.s32 %s23, %s42
      %s126 = ssub.s32 %s24, %s38
      %s127 = sor.u32 %s125, %s126
      %p128 = scmp.eq.s32.totalorder %s127, 0
      %s130 = sadd.s32 %s129, 1
      %s131 = scalar_select %p128, %s129, %s130
      %p134 = pneg %p128
      %p135 = scmp.eq.s32.totalorder %s16, 1
      %p136 = por %p134, %p135
      %p137 = scmp.ne.s32.totalorder %s129, %s132
      %p138 = scmp.eq.s32.totalorder %s16, 0
      %p139 = por %p137, %p138
      %p140 = scmp.ne.s32.totalorder %s129, %s132
      %p141 = scmp.eq.s32.totalorder %s21, 1
      %p142 = por %p140, %p141
      %p143 = scmp.ne.s32.totalorder %s132, %s133
      %p144 = scmp.eq.s32.totalorder %s21, 0
      %p145 = por %p143, %p144
      %p146 = scmp.ne.s32.totalorder %s132, %s133
      %p147 = scmp.eq.s32.totalorder %s22, 1
      %p148 = por %p146, %p147
      %p150 = scmp.ne.s32.totalorder %s133, %s149
      %p151 = scmp.eq.s32.totalorder %s22, 0
      %p152 = por %p150, %p151
      %p153 = scmp.le.s32.totalorder 1, %s16
      %p154 = scmp.lt.s32.totalorder %s16, 3
      %p155 = pnand %p153, %p154
      %p156 = pneg %p155
      // Predicated region
      $region9: #{tpu_custom_call.1} parent=5 // pred_check
        _
      $region10: #{tpu_custom_call.1} parent=5 // pred_check_branch
        %158 = sbr.rel (%p155) target = $region12
      $region11: #{tpu_custom_call.1} parent=5 // pred_region
        %s159 = ssub.s32 %s16, 1
        // Predicated region
        $region13: #{tpu_custom_call.1} parent=11 // pred_check
          %p160 = pneg %p91
        $region14: #{tpu_custom_call.1} parent=11 // pred_check_branch
          %162 = sbr.rel (%p160) target = $region16
        $region15: #{tpu_custom_call.1} parent=11 // pred_region
          %s163 = smul.u32 16, %s28
          %s165 = ssub.s32 2048, 2048
          %166 = vsyncadd [#allocation7], %s165
          %s167 = sadd.s32 %s27, %s163
          %s168 = smul.addr %s167, 128
          %s169 = scalar_lea.hbm %s1, %s168
          %s170 = sshll.u32 [#allocation6], 4
          %s171 = int_to_ptr.vmem [resolvable:$true] %s170
          %176 = dma.hbm_to_vmem [thread:$0]  %s169, 2048, %s171, [#allocation7], 128, 128, 8
        $region16: #{tpu_custom_call.1} parent=11 // pred_fallthru
          _
        // Predicated region
        $region17: #{tpu_custom_call.1} parent=11 // pred_check
          %p177 = pneg %p117
        $region18: #{tpu_custom_call.1} parent=11 // pred_check_branch
          %179 = sbr.rel (%p177) target = $region20
        $region19: #{tpu_custom_call.1} parent=11 // pred_region
          %p180 = scmp.lt.s32.totalorder %s27, 0
          %s181 = scalar_select %p180, %s27, 0
          %s182 = scalar_lea.vmem %s2, %s181
        $region20: #{tpu_custom_call.1} parent=11 // pred_fallthru
          _
      $region12: #{tpu_custom_call.1} parent=5 // pred_fallthru
        _
      %p183 = scmp.lt.s32.totalorder %s16, 2
      // Predicated region
      $region21: #{tpu_custom_call.1} parent=5 // pred_check
        %p184 = pneg %p183
      $region22: #{tpu_custom_call.1} parent=5 // pred_check_branch
        %186 = sbr.rel (%p184) target = $region24
      $region23: #{tpu_custom_call.1} parent=5 // pred_region
        // Predicated region
        $region25: #{tpu_custom_call.1} parent=23 // pred_check
          %p187 = pneg %p57
        $region26: #{tpu_custom_call.1} parent=23 // pred_check_branch
          %189 = sbr.rel (%p187) target = $region28
        $region27: #{tpu_custom_call.1} parent=23 // pred_region
          %s190 = sand.u32 %s47, 1
          %s191 = scalar_lea.sflag [#allocation4], %s190
          %s192 = sand.u32 %s47, 1
          %s193 = smul.addr %s192, 256
          %s194 = scalar_lea.vmem [#allocation3], %s193
          %s195 = smul.u32 32, %s23
          %s197 = ssub.s32 4096, 4096
          %198 = vsyncadd %s191, %s197
          %s199 = sadd.s32 %s25, %s195
          %s200 = smul.addr %s199, 128
          %s201 = scalar_lea.hbm %s0, %s200
          %s202 = sshll.u32 %s194, 4
          %s203 = int_to_ptr.vmem [resolvable:$true] %s202
          %208 = dma.hbm_to_vmem [thread:$0]  %s201, 4096, %s203, %s191, 128, 128, 8
        $region28: #{tpu_custom_call.1} parent=23 // pred_fallthru
          _
      $region24: #{tpu_custom_call.1} parent=5 // pred_fallthru
        _
      %p209 = scmp.le.s32.totalorder 1, %s16
      %p210 = scmp.lt.s32.totalorder %s16, 3
      %p211 = pnand %p209, %p210
      %p212 = pneg %p211
      // Predicated region
      $region29: #{tpu_custom_call.1} parent=5 // pred_check
        _
      $region30: #{tpu_custom_call.1} parent=5 // pred_check_branch
        %214 = sbr.rel (%p211) target = $region32
      $region31: #{tpu_custom_call.1} parent=5 // pred_region
        %s215 = ssub.s32 %s16, 1
        %s216 = sand.u32 %s50, 1
        %s217 = scalar_lea.sflag [#allocation4], %s216
        %s218 = sand.u32 %s50, 1
        %s219 = smul.addr %s218, 256
        %s220 = scalar_lea.vmem [#allocation3], %s219
        // Predicated region
        $region33: #{tpu_custom_call.1} parent=31 // pred_check
          %p221 = pneg %p63
        $region34: #{tpu_custom_call.1} parent=31 // pred_check_branch
          %223 = sbr.rel (%p221) target = $region36
        $region35: #{tpu_custom_call.1} parent=31 // pred_region
          %224 = dma.done %s217, 4096
        $region36: #{tpu_custom_call.1} parent=31 // pred_fallthru
          _
        // Predicated region
        $region37: #{tpu_custom_call.1} parent=31 // pred_check
          %p225 = pneg %p91
        $region38: #{tpu_custom_call.1} parent=31 // pred_check_branch
          %227 = sbr.rel (%p225) target = $region40
        $region39: #{tpu_custom_call.1} parent=31 // pred_region
          %228 = dma.done [#allocation7], 2048
        $region40: #{tpu_custom_call.1} parent=31 // pred_fallthru
          _
        %s229 = sand.u32 %s50, 1
        %s230 = scalar_lea.sflag [#allocation4], %s229
        %s231 = sand.u32 %s50, 1
        %s232 = smul.addr %s231, 256
        %s233 = scalar_lea.vmem [#allocation3], %s232
        %p234 = pneg %p63
        %p235 = pneg %p60
        %p236 = pneg %p91
        %p237 = pneg %p88
        %p238 = scmp.lt.s32.totalorder %s27, 0
        %s239 = scalar_select %p238, %s27, 0
        %s240 = scalar_lea.vmem %s2, %s239
        %p241 = pneg %p117
        %p242 = pneg %p114
        %p243 = pneg %p145
        %p244 = pneg %p142
        %s245 = sand.u32 %s132, 1
        %s246 = scalar_lea.sflag [#allocation5], %s245
        %s247 = sand.u32 %s132, 1
        %s248 = smul.addr %s247, 256
        %s249 = scalar_lea.vmem [#allocation8], %s248
        %s250 = smul.u32 32, %s26
        %s251 = smul.u32 16, %s28
        %p252 = scmp.lt.s32.totalorder %s27, 0
        %s253 = scalar_select %p252, %s27, 0
        %s254 = scalar_lea.vmem %s2, %s253
        %s255 = smul.u32 32, %s26
        %p256 = scmp.eq.s32.totalorder %s28, 0
        // Predicated region
        $region41: #{tpu_custom_call.1} parent=31 // pred_check
          %p257 = pneg %p256
        $region42: #{tpu_custom_call.1} parent=31 // pred_check_branch
          %259 = sbr.rel (%p257) target = $region44
        $region43: #{tpu_custom_call.1} parent=31 // pred_region
          %260 = vst [vmem:[#allocation2] sm:$0xff] 0.0
          %261 = vst [vmem:[#allocation2 + $0x8] sm:$0xff] 0.0
          %262 = vst [vmem:[#allocation2 + $0x10] sm:$0xff] 0.0
          %263 = vst [vmem:[#allocation2 + $0x18] sm:$0xff] 0.0
          %264 = vst [vmem:[#allocation2 + $0x20] sm:$0xff] 0.0
          %265 = vst [vmem:[#allocation2 + $0x28] sm:$0xff] 0.0
          %266 = vst [vmem:[#allocation2 + $0x30] sm:$0xff] 0.0
          %267 = vst [vmem:[#allocation2 + $0x38] sm:$0xff] 0.0
          %268 = vst [vmem:[#allocation2 + $0x40] sm:$0xff] 0.0
          %269 = vst [vmem:[#allocation2 + $0x48] sm:$0xff] 0.0
          %270 = vst [vmem:[#allocation2 + $0x50] sm:$0xff] 0.0
          %271 = vst [vmem:[#allocation2 + $0x58] sm:$0xff] 0.0
          %272 = vst [vmem:[#allocation2 + $0x60] sm:$0xff] 0.0
          %273 = vst [vmem:[#allocation2 + $0x68] sm:$0xff] 0.0
          %274 = vst [vmem:[#allocation2 + $0x70] sm:$0xff] 0.0
          %275 = vst [vmem:[#allocation2 + $0x78] sm:$0xff] 0.0
          %276 = vst [vmem:[#allocation2 + $0x80] sm:$0xff] 0.0
          %277 = vst [vmem:[#allocation2 + $0x88] sm:$0xff] 0.0
          %278 = vst [vmem:[#allocation2 + $0x90] sm:$0xff] 0.0
          %279 = vst [vmem:[#allocation2 + $0x98] sm:$0xff] 0.0
          %280 = vst [vmem:[#allocation2 + $0xa0] sm:$0xff] 0.0
          %281 = vst [vmem:[#allocation2 + $0xa8] sm:$0xff] 0.0
          %282 = vst [vmem:[#allocation2 + $0xb0] sm:$0xff] 0.0
          %283 = vst [vmem:[#allocation2 + $0xb8] sm:$0xff] 0.0
          %284 = vst [vmem:[#allocation2 + $0xc0] sm:$0xff] 0.0
          %285 = vst [vmem:[#allocation2 + $0xc8] sm:$0xff] 0.0
          %286 = vst [vmem:[#allocation2 + $0xd0] sm:$0xff] 0.0
          %287 = vst [vmem:[#allocation2 + $0xd8] sm:$0xff] 0.0
          %288 = vst [vmem:[#allocation2 + $0xe0] sm:$0xff] 0.0
          %289 = vst [vmem:[#allocation2 + $0xe8] sm:$0xff] 0.0
          %290 = vst [vmem:[#allocation2 + $0xf0] sm:$0xff] 0.0
          %291 = vst [vmem:[#allocation2 + $0xf8] sm:$0xff] 0.0
        $region44: #{tpu_custom_call.1} parent=31 // pred_fallthru
          _
        %v292 = vld [vmem:[#allocation2] sm:$0xff]
        %v293 = vld [vmem:[#allocation2 + $0x8] sm:$0xff]
        %v294 = vld [vmem:[#allocation2 + $0x10] sm:$0xff]
        %v295 = vld [vmem:[#allocation2 + $0x18] sm:$0xff]
        %v296 = vld [vmem:[#allocation2 + $0x20] sm:$0xff]
        %v297 = vld [vmem:[#allocation2 + $0x28] sm:$0xff]
        %v298 = vld [vmem:[#allocation2 + $0x30] sm:$0xff]
        %v299 = vld [vmem:[#allocation2 + $0x38] sm:$0xff]
        %v300 = vld [vmem:[#allocation2 + $0x40] sm:$0xff]
        %v301 = vld [vmem:[#allocation2 + $0x48] sm:$0xff]
        %v302 = vld [vmem:[#allocation2 + $0x50] sm:$0xff]
        %v303 = vld [vmem:[#allocation2 + $0x58] sm:$0xff]
        %v304 = vld [vmem:[#allocation2 + $0x60] sm:$0xff]
        %v305 = vld [vmem:[#allocation2 + $0x68] sm:$0xff]
        %v306 = vld [vmem:[#allocation2 + $0x70] sm:$0xff]
        %v307 = vld [vmem:[#allocation2 + $0x78] sm:$0xff]
        %v308 = vld [vmem:[#allocation2 + $0x80] sm:$0xff]
        %v309 = vld [vmem:[#allocation2 + $0x88] sm:$0xff]
        %v310 = vld [vmem:[#allocation2 + $0x90] sm:$0xff]
        %v311 = vld [vmem:[#allocation2 + $0x98] sm:$0xff]
        %v312 = vld [vmem:[#allocation2 + $0xa0] sm:$0xff]
        %v313 = vld [vmem:[#allocation2 + $0xa8] sm:$0xff]
        %v314 = vld [vmem:[#allocation2 + $0xb0] sm:$0xff]
        %v315 = vld [vmem:[#allocation2 + $0xb8] sm:$0xff]
        %v316 = vld [vmem:[#allocation2 + $0xc0] sm:$0xff]
        %v317 = vld [vmem:[#allocation2 + $0xc8] sm:$0xff]
        %v318 = vld [vmem:[#allocation2 + $0xd0] sm:$0xff]
        %v319 = vld [vmem:[#allocation2 + $0xd8] sm:$0xff]
        %v320 = vld [vmem:[#allocation2 + $0xe0] sm:$0xff]
        %v321 = vld [vmem:[#allocation2 + $0xe8] sm:$0xff]
        %v322 = vld [vmem:[#allocation2 + $0xf0] sm:$0xff]
        %v323 = vld [vmem:[#allocation2 + $0xf8] sm:$0xff]
        %v324 = vld [vmem:[%s220] sm:$0xff]
        %v325 = vld [vmem:[%s220 + $0x8] sm:$0xff]
        %v326 = vld [vmem:[%s220 + $0x10] sm:$0xff]
        %v327 = vld [vmem:[%s220 + $0x18] sm:$0xff]
        %v328 = vld [vmem:[%s220 + $0x20] sm:$0xff]
        %v329 = vld [vmem:[%s220 + $0x28] sm:$0xff]
        %v330 = vld [vmem:[%s220 + $0x30] sm:$0xff]
        %v331 = vld [vmem:[%s220 + $0x38] sm:$0xff]
        %v332 = vld [vmem:[%s220 + $0x40] sm:$0xff]
        %v333 = vld [vmem:[%s220 + $0x48] sm:$0xff]
        %v334 = vld [vmem:[%s220 + $0x50] sm:$0xff]
        %v335 = vld [vmem:[%s220 + $0x58] sm:$0xff]
        %v336 = vld [vmem:[%s220 + $0x60] sm:$0xff]
        %v337 = vld [vmem:[%s220 + $0x68] sm:$0xff]
        %v338 = vld [vmem:[%s220 + $0x70] sm:$0xff]
        %v339 = vld [vmem:[%s220 + $0x78] sm:$0xff]
        %v340 = vld [vmem:[%s220 + $0x80] sm:$0xff]
        %v341 = vld [vmem:[%s220 + $0x88] sm:$0xff]
        %v342 = vld [vmem:[%s220 + $0x90] sm:$0xff]
        %v343 = vld [vmem:[%s220 + $0x98] sm:$0xff]
        %v344 = vld [vmem:[%s220 + $0xa0] sm:$0xff]
        %v345 = vld [vmem:[%s220 + $0xa8] sm:$0xff]
        %v346 = vld [vmem:[%s220 + $0xb0] sm:$0xff]
        %v347 = vld [vmem:[%s220 + $0xb8] sm:$0xff]
        %v348 = vld [vmem:[%s220 + $0xc0] sm:$0xff]
        %v349 = vld [vmem:[%s220 + $0xc8] sm:$0xff]
        %v350 = vld [vmem:[%s220 + $0xd0] sm:$0xff]
        %v351 = vld [vmem:[%s220 + $0xd8] sm:$0xff]
        %v352 = vld [vmem:[%s220 + $0xe0] sm:$0xff]
        %v353 = vld [vmem:[%s220 + $0xe8] sm:$0xff]
        %v354 = vld [vmem:[%s220 + $0xf0] sm:$0xff]
        %v355 = vld [vmem:[%s220 + $0xf8] sm:$0xff]
        %v356 = vld [vmem:[#allocation6] sm:$0xff]
        %v357 = vld [vmem:[#allocation6 + $0x8] sm:$0xff]
        %v358 = vld [vmem:[#allocation6 + $0x10] sm:$0xff]
        %v359 = vld [vmem:[#allocation6 + $0x18] sm:$0xff]
        %v360 = vld [vmem:[#allocation6 + $0x20] sm:$0xff]
        %v361 = vld [vmem:[#allocation6 + $0x28] sm:$0xff]
        %v362 = vld [vmem:[#allocation6 + $0x30] sm:$0xff]
        %v363 = vld [vmem:[#allocation6 + $0x38] sm:$0xff]
        %v364 = vld [vmem:[#allocation6 + $0x40] sm:$0xff]
        %v365 = vld [vmem:[#allocation6 + $0x48] sm:$0xff]
        %v366 = vld [vmem:[#allocation6 + $0x50] sm:$0xff]
        %v367 = vld [vmem:[#allocation6 + $0x58] sm:$0xff]
        %v368 = vld [vmem:[#allocation6 + $0x60] sm:$0xff]
        %v369 = vld [vmem:[#allocation6 + $0x68] sm:$0xff]
        %v370 = vld [vmem:[#allocation6 + $0x70] sm:$0xff]
        %v371 = vld [vmem:[#allocation6 + $0x78] sm:$0xff]
        %372 = vmatprep.subr.mxu0 0.0
        %v373 = vand.u32 %v356, 4294901760
        %374 = vmatpush1.msra.mxu0 %v373
        %375 = vmatprep.subr.mxu0 0.0
        %v376 = vand.u32 %v357, 4294901760
        %377 = vmatpush1.msra.mxu0 %v376
        %378 = vmatprep.subr.mxu0 0.0
        %v379 = vand.u32 %v358, 4294901760
        %380 = vmatpush1.msra.mxu0 %v379
        %381 = vmatprep.subr.mxu0 0.0
        %v382 = vand.u32 %v359, 4294901760
        %383 = vmatpush1.msra.mxu0 %v382
        %384 = vmatprep.subr.mxu0 0.0
        %v385 = vand.u32 %v360, 4294901760
        %386 = vmatpush1.msra.mxu0 %v385
        %387 = vmatprep.subr.mxu0 0.0
        %v388 = vand.u32 %v361, 4294901760
        %389 = vmatpush1.msra.mxu0 %v388
        %390 = vmatprep.subr.mxu0 0.0
        %v391 = vand.u32 %v362, 4294901760
        %392 = vmatpush1.msra.mxu0 %v391
        %393 = vmatprep.subr.mxu0 0.0
        %v394 = vand.u32 %v363, 4294901760
        %395 = vmatpush1.msra.mxu0 %v394
        %396 = vmatprep.subr.mxu0 0.0
        %v397 = vand.u32 %v364, 4294901760
        %398 = vmatpush1.msra.mxu0 %v397
        %399 = vmatprep.subr.mxu0 0.0
        %v400 = vand.u32 %v365, 4294901760
        %401 = vmatpush1.msra.mxu0 %v400
        %402 = vmatprep.subr.mxu0 0.0
        %v403 = vand.u32 %v366, 4294901760
        %404 = vmatpush1.msra.mxu0 %v403
        %405 = vmatprep.subr.mxu0 0.0
        %v406 = vand.u32 %v367, 4294901760
        %407 = vmatpush1.msra.mxu0 %v406
        %408 = vmatprep.subr.mxu0 0.0
        %v409 = vand.u32 %v368, 4294901760
        %410 = vmatpush1.msra.mxu0 %v409
        %411 = vmatprep.subr.mxu0 0.0
        %v412 = vand.u32 %v369, 4294901760
        %413 = vmatpush1.msra.mxu0 %v412
        %414 = vmatprep.subr.mxu0 0.0
        %v415 = vand.u32 %v370, 4294901760
        %416 = vmatpush1.msra.mxu0 %v415
        %417 = vmatprep.subr.mxu0 0.0
        %v418 = vand.u32 %v371, 4294901760
        %419 = vmatpush1.msra.mxu0 %v418
        %420 = vmatprep.subr.mxu0 0.0
        %421 = vmatpush1.msra.mxu0 0.0
        %422 = vmatprep.subr.mxu0 0.0
        %423 = vmatpush1.msra.mxu0 0.0
        %424 = vmatprep.subr.mxu0 0.0
        %425 = vmatpush1.msra.mxu0 0.0
        %426 = vmatprep.subr.mxu0 0.0
        %427 = vmatpush1.msra.mxu0 0.0
        %428 = vmatprep.subr.mxu0 0.0
        %429 = vmatpush1.msra.mxu0 0.0
        %430 = vmatprep.subr.mxu0 0.0
        %431 = vmatpush1.msra.mxu0 0.0
        %432 = vmatprep.subr.mxu0 0.0
        %433 = vmatpush1.msra.mxu0 0.0
        %434 = vmatprep.subr.mxu0 0.0
        %435 = vmatpush1.msra.mxu0 0.0
        %436 = vmatprep.subr.mxu0 0.0
        %437 = vmatpush1.msra.mxu0 0.0
        %438 = vmatprep.subr.mxu0 0.0
        %439 = vmatpush1.msra.mxu0 0.0
        %440 = vmatprep.subr.mxu0 0.0
        %441 = vmatpush1.msra.mxu0 0.0
        %442 = vmatprep.subr.mxu0 0.0
        %443 = vmatpush1.msra.mxu0 0.0
        %444 = vmatprep.subr.mxu0 0.0
        %445 = vmatpush1.msra.mxu0 0.0
        %446 = vmatprep.subr.mxu0 0.0
        %447 = vmatpush1.msra.mxu0 0.0
        %448 = vmatprep.subr.mxu0 0.0
        %449 = vmatpush1.msra.mxu0 0.0
        %450 = vmatprep.subr.mxu0 0.0
        %451 = vmatpush1.msra.mxu0 0.0
        %452 = vmatprep.mubr.f32.mxu0 0.0
        %v453 = vand.u32 %v324, 4294901760
        %v454 = vsub.f32 %v324, %v453
        %v455 = vand.u32 %v454, 4294901760
        %v456 = vsub.f32 %v454, %v455
        %v457 = vand.u32 %v456, 4294901760
        %458 = vmatmul.mubr.f32.gmra.mrb[0].mxu0 %v457
        %v459 = vpop.f32.mrb[0].mxu0
        %v460 = vadd.f32 0.0, %v459
        %v461 = vpop.f32.mrb[0].mxu0
        %462 = vmatprep.mubr.f32.mxu0 0.0
        %v463 = vand.u32 %v325, 4294901760
        %v464 = vsub.f32 %v325, %v463
        %v465 = vand.u32 %v464, 4294901760
        %v466 = vsub.f32 %v464, %v465
        %v467 = vand.u32 %v466, 4294901760
        %468 = vmatmul.mubr.f32.gmra.mrb[0].mxu0 %v467
        %v469 = vpop.f32.mrb[0].mxu0
        %v470 = vadd.f32 0.0, %v469
        %v471 = vpop.f32.mrb[0].mxu0
        %472 = vmatprep.mubr.f32.mxu0 0.0
        %v473 = vand.u32 %v326, 4294901760
        %v474 = vsub.f32 %v326, %v473
        %v475 = vand.u32 %v474, 4294901760
        %v476 = vsub.f32 %v474, %v475
        %v477 = vand.u32 %v476, 4294901760
        %478 = vmatmul.mubr.f32.gmra.mrb[0].mxu0 %v477
        %v479 = vpop.f32.mrb[0].mxu0
        %v480 = vadd.f32 0.0, %v479
        %v481 = vpop.f32.mrb[0].mxu0
        %482 = vmatprep.mubr.f32.mxu0 0.0
        %v483 = vand.u32 %v327, 4294901760
        %v484 = vsub.f32 %v327, %v483
        %v485 = vand.u32 %v484, 4294901760
        %v486 = vsub.f32 %v484, %v485
        %v487 = vand.u32 %v486, 4294901760
        %488 = vmatmul.mubr.f32.gmra.mrb[0].mxu0 %v487
        %v489 = vpop.f32.mrb[0].mxu0
        %v490 = vadd.f32 0.0, %v489
        %v491 = vpop.f32.mrb[0].mxu0
        %492 = vmatprep.mubr.f32.mxu0 0.0
        %v493 = vand.u32 %v328, 4294901760
        %v494 = vsub.f32 %v328, %v493
        %v495 = vand.u32 %v494, 4294901760
        %v496 = vsub.f32 %v494, %v495
        %v497 = vand.u32 %v496, 4294901760
        %498 = vmatmul.mubr.f32.gmra.mrb[0].mxu0 %v497
        %v499 = vpop.f32.mrb[0].mxu0
        %v500 = vadd.f32 0.0, %v499
        %v501 = vpop.f32.mrb[0].mxu0
        %502 = vmatprep.mubr.f32.mxu0 0.0
        %v503 = vand.u32 %v329, 4294901760
        %v504 = vsub.f32 %v329, %v503
        %v505 = vand.u32 %v504, 4294901760
        %v506 = vsub.f32 %v504, %v505
        %v507 = vand.u32 %v506, 4294901760
        %508 = vmatmul.mubr.f32.gmra.mrb[0].mxu0 %v507
        %v509 = vpop.f32.mrb[0].mxu0
        %v510 = vadd.f32 0.0, %v509
        %v511 = vpop.f32.mrb[0].mxu0
        %512 = vmatprep.mubr.f32.mxu0 0.0
        %v513 = vand.u32 %v330, 4294901760
        %v514 = vsub.f32 %v330, %v513
        %v515 = vand.u32 %v514, 4294901760
        %v516 = vsub.f32 %v514, %v515
        %v517 = vand.u32 %v516, 4294901760
        %518 = vmatmul.mubr.f32.gmra.mrb[0].mxu0 %v517
        %v519 = vpop.f32.mrb[0].mxu0
        %v520 = vadd.f32 0.0, %v519
        %v521 = vpop.f32.mrb[0].mxu0
        %522 = vmatprep.mubr.f32.mxu0 0.0
        %v523 = vand.u32 %v331, 4294901760
        %v524 = vsub.f32 %v331, %v523
        %v525 = vand.u32 %v524, 4294901760
        %v526 = vsub.f32 %v524, %v525
        %v527 = vand.u32 %v526, 4294901760
        %528 = vmatmul.mubr.f32.gmra.mrb[0].mxu0 %v527
        %v529 = vpop.f32.mrb[0].mxu0
        %v530 = vadd.f32 0.0, %v529
        %v531 = vpop.f32.mrb[0].mxu0
        %532 = vmatprep.mubr.f32.mxu0 0.0
        %v533 = vand.u32 %v332, 4294901760
        %v534 = vsub.f32 %v332, %v533
        %v535 = vand.u32 %v534, 4294901760
        %v536 = vsub.f32 %v534, %v535
        %v537 = vand.u32 %v536, 4294901760
        %538 = vmatmul.mubr.f32.gmra.mrb[0].mxu0 %v537
        %v539 = vpop.f32.mrb[0].mxu0
        %v540 = vadd.f32 0.0, %v539
        %v541 = vpop.f32.mrb[0].mxu0
        %542 = vmatprep.mubr.f32.mxu0 0.0
        %v543 = vand.u32 %v333, 4294901760
        %v544 = vsub.f32 %v333, %v543
        %v545 = vand.u32 %v544, 4294901760
        %v546 = vsub.f32 %v544, %v545
        %v547 = vand.u32 %v546, 4294901760
        %548 = vmatmul.mubr.f32.gmra.mrb[0].mxu0 %v547
        %v549 = vpop.f32.mrb[0].mxu0
        %v550 = vadd.f32 0.0, %v549
        %v551 = vpop.f32.mrb[0].mxu0
        %552 = vmatprep.mubr.f32.mxu0 0.0
        %v553 = vand.u32 %v334, 4294901760
        %v554 = vsub.f32 %v334, %v553
        %v555 = vand.u32 %v554, 4294901760
        %v556 = vsub.f32 %v554, %v555
        %v557 = vand.u32 %v556, 4294901760
        %558 = vmatmul.mubr.f32.gmra.mrb[0].mxu0 %v557
        %v559 = vpop.f32.mrb[0].mxu0
        %v560 = vadd.f32 0.0, %v559
        %v561 = vpop.f32.mrb[0].mxu0
        %562 = vmatprep.mubr.f32.mxu0 0.0
        %v563 = vand.u32 %v335, 4294901760
        %v564 = vsub.f32 %v335, %v563
        %v565 = vand.u32 %v564, 4294901760
        %v566 = vsub.f32 %v564, %v565
        %v567 = vand.u32 %v566, 4294901760
        %568 = vmatmul.mubr.f32.gmra.mrb[0].mxu0 %v567
        %v569 = vpop.f32.mrb[0].mxu0
        %v570 = vadd.f32 0.0, %v569
        %v571 = vpop.f32.mrb[0].mxu0
        %572 = vmatprep.mubr.f32.mxu0 0.0
        %v573 = vand.u32 %v336, 4294901760
        %v574 = vsub.f32 %v336, %v573
        %v575 = vand.u32 %v574, 4294901760
        %v576 = vsub.f32 %v574, %v575
        %v577 = vand.u32 %v576, 4294901760
        %578 = vmatmul.mubr.f32.gmra.mrb[0].mxu0 %v577
        %v579 = vpop.f32.mrb[0].mxu0
        %v580 = vadd.f32 0.0, %v579
        %v581 = vpop.f32.mrb[0].mxu0
        %582 = vmatprep.mubr.f32.mxu0 0.0
        %v583 = vand.u32 %v337, 4294901760
        %v584 = vsub.f32 %v337, %v583
        %v585 = vand.u32 %v584, 4294901760
        %v586 = vsub.f32 %v584, %v585
        %v587 = vand.u32 %v586, 4294901760
        %588 = vmatmul.mubr.f32.gmra.mrb[0].mxu0 %v587
        %v589 = vpop.f32.mrb[0].mxu0
        %v590 = vadd.f32 0.0, %v589
        %v591 = vpop.f32.mrb[0].mxu0
        %592 = vmatprep.mubr.f32.mxu0 0.0
        %v593 = vand.u32 %v338, 4294901760
        %v594 = vsub.f32 %v338, %v593
        %v595 = vand.u32 %v594, 4294901760
        %v596 = vsub.f32 %v594, %v595
        %v597 = vand.u32 %v596, 4294901760
        %598 = vmatmul.mubr.f32.gmra.mrb[0].mxu0 %v597
        %v599 = vpop.f32.mrb[0].mxu0
        %v600 = vadd.f32 0.0, %v599
        %v601 = vpop.f32.mrb[0].mxu0
        %602 = vmatprep.mubr.f32.mxu0 0.0
        %v603 = vand.u32 %v339, 4294901760
        %v604 = vsub.f32 %v339, %v603
        %v605 = vand.u32 %v604, 4294901760
        %v606 = vsub.f32 %v604, %v605
        %v607 = vand.u32 %v606, 4294901760
        %608 = vmatmul.mubr.f32.gmra.mrb[0].mxu0 %v607
        %v609 = vpop.f32.mrb[0].mxu0
        %v610 = vadd.f32 0.0, %v609
        %v611 = vpop.f32.mrb[0].mxu0
        %612 = vmatprep.mubr.f32.mxu0 0.0
        %v613 = vand.u32 %v340, 4294901760
        %v614 = vsub.f32 %v340, %v613
        %v615 = vand.u32 %v614, 4294901760
        %v616 = vsub.f32 %v614, %v615
        %v617 = vand.u32 %v616, 4294901760
        %618 = vmatmul.mubr.f32.gmra.mrb[0].mxu0 %v617
        %v619 = vpop.f32.mrb[0].mxu0
        %v620 = vadd.f32 0.0, %v619
        %v621 = vpop.f32.mrb[0].mxu0
        %622 = vmatprep.mubr.f32.mxu0 0.0
        %v623 = vand.u32 %v341, 4294901760
        %v624 = vsub.f32 %v341, %v623
        %v625 = vand.u32 %v624, 4294901760
        %v626 = vsub.f32 %v624, %v625
        %v627 = vand.u32 %v626, 4294901760
        %628 = vmatmul.mubr.f32.gmra.mrb[0].mxu0 %v627
        %v629 = vpop.f32.mrb[0].mxu0
        %v630 = vadd.f32 0.0, %v629
        %v631 = vpop.f32.mrb[0].mxu0
        %632 = vmatprep.mubr.f32.mxu0 0.0
        %v633 = vand.u32 %v342, 4294901760
        %v634 = vsub.f32 %v342, %v633
        %v635 = vand.u32 %v634, 4294901760
        %v636 = vsub.f32 %v634, %v635
        %v637 = vand.u32 %v636, 4294901760
        %638 = vmatmul.mubr.f32.gmra.mrb[0].mxu0 %v637
        %v639 = vpop.f32.mrb[0].mxu0
        %v640 = vadd.f32 0.0, %v639
        %v641 = vpop.f32.mrb[0].mxu0
        %642 = vmatprep.mubr.f32.mxu0 0.0
        %v643 = vand.u32 %v343, 4294901760
        %v644 = vsub.f32 %v343, %v643
        %v645 = vand.u32 %v644, 4294901760
        %v646 = vsub.f32 %v644, %v645
        %v647 = vand.u32 %v646, 4294901760
        %648 = vmatmul.mubr.f32.gmra.mrb[0].mxu0 %v647
        %v649 = vpop.f32.mrb[0].mxu0
        %v650 = vadd.f32 0.0, %v649
        %v651 = vpop.f32.mrb[0].mxu0
        %652 = vmatprep.mubr.f32.mxu0 0.0
        %v653 = vand.u32 %v344, 4294901760
        %v654 = vsub.f32 %v344, %v653
        %v655 = vand.u32 %v654, 4294901760
        %v656 = vsub.f32 %v654, %v655
        %v657 = vand.u32 %v656, 4294901760
        %658 = vmatmul.mubr.f32.gmra.mrb[0].mxu0 %v657
        %v659 = vpop.f32.mrb[0].mxu0
        %v660 = vadd.f32 0.0, %v659
        %v661 = vpop.f32.mrb[0].mxu0
        %662 = vmatprep.mubr.f32.mxu0 0.0
        %v663 = vand.u32 %v345, 4294901760
        %v664 = vsub.f32 %v345, %v663
        %v665 = vand.u32 %v664, 4294901760
        %v666 = vsub.f32 %v664, %v665
        %v667 = vand.u32 %v666, 4294901760
        %668 = vmatmul.mubr.f32.gmra.mrb[0].mxu0 %v667
        %v669 = vpop.f32.mrb[0].mxu0
        %v670 = vadd.f32 0.0, %v669
        %v671 = vpop.f32.mrb[0].mxu0
        %672 = vmatprep.mubr.f32.mxu0 0.0
        %v673 = vand.u32 %v346, 4294901760
        %v674 = vsub.f32 %v346, %v673
        %v675 = vand.u32 %v674, 4294901760
        %v676 = vsub.f32 %v674, %v675
        %v677 = vand.u32 %v676, 4294901760
        %678 = vmatmul.mubr.f32.gmra.mrb[0].mxu0 %v677
        %v679 = vpop.f32.mrb[0].mxu0
        %v680 = vadd.f32 0.0, %v679
        %v681 = vpop.f32.mrb[0].mxu0
        %682 = vmatprep.mubr.f32.mxu0 0.0
        %v683 = vand.u32 %v347, 4294901760
        %v684 = vsub.f32 %v347, %v683
        %v685 = vand.u32 %v684, 4294901760
        %v686 = vsub.f32 %v684, %v685
        %v687 = vand.u32 %v686, 4294901760
        %688 = vmatmul.mubr.f32.gmra.mrb[0].mxu0 %v687
        %v689 = vpop.f32.mrb[0].mxu0
        %v690 = vadd.f32 0.0, %v689
        %v691 = vpop.f32.mrb[0].mxu0
        %692 = vmatprep.mubr.f32.mxu0 0.0
        %v693 = vand.u32 %v348, 4294901760
        %v694 = vsub.f32 %v348, %v693
        %v695 = vand.u32 %v694, 4294901760
        %v696 = vsub.f32 %v694, %v695
        %v697 = vand.u32 %v696, 4294901760
        %698 = vmatmul.mubr.f32.gmra.mrb[0].mxu0 %v697
        %v699 = vpop.f32.mrb[0].mxu0
        %v700 = vadd.f32 0.0, %v699
        %v701 = vpop.f32.mrb[0].mxu0
        %702 = vmatprep.mubr.f32.mxu0 0.0
        %v703 = vand.u32 %v349, 4294901760
        %v704 = vsub.f32 %v349, %v703
        %v705 = vand.u32 %v704, 4294901760
        %v706 = vsub.f32 %v704, %v705
        %v707 = vand.u32 %v706, 4294901760
        %708 = vmatmul.mubr.f32.gmra.mrb[0].mxu0 %v707
        %v709 = vpop.f32.mrb[0].mxu0
        %v710 = vadd.f32 0.0, %v709
        %v711 = vpop.f32.mrb[0].mxu0
        %712 = vmatprep.mubr.f32.mxu0 0.0
        %v713 = vand.u32 %v350, 4294901760
        %v714 = vsub.f32 %v350, %v713
        %v715 = vand.u32 %v714, 4294901760
        %v716 = vsub.f32 %v714, %v715
        %v717 = vand.u32 %v716, 4294901760
        %718 = vmatmul.mubr.f32.gmra.mrb[0].mxu0 %v717
        %v719 = vpop.f32.mrb[0].mxu0
        %v720 = vadd.f32 0.0, %v719
        %v721 = vpop.f32.mrb[0].mxu0
        %722 = vmatprep.mubr.f32.mxu0 0.0
        %v723 = vand.u32 %v351, 4294901760
        %v724 = vsub.f32 %v351, %v723
        %v725 = vand.u32 %v724, 4294901760
        %v726 = vsub.f32 %v724, %v725
        %v727 = vand.u32 %v726, 4294901760
        %728 = vmatmul.mubr.f32.gmra.mrb[0].mxu0 %v727
        %v729 = vpop.f32.mrb[0].mxu0
        %v730 = vadd.f32 0.0, %v729
        %v731 = vpop.f32.mrb[0].mxu0
        %732 = vmatprep.mubr.f32.mxu0 0.0
        %v733 = vand.u32 %v352, 4294901760
        %v734 = vsub.f32 %v352, %v733
        %v735 = vand.u32 %v734, 4294901760
        %v736 = vsub.f32 %v734, %v735
        %v737 = vand.u32 %v736, 4294901760
        %738 = vmatmul.mubr.f32.gmra.mrb[0].mxu0 %v737
        %v739 = vpop.f32.mrb[0].mxu0
        %v740 = vadd.f32 0.0, %v739
        %v741 = vpop.f32.mrb[0].mxu0
        %742 = vmatprep.mubr.f32.mxu0 0.0
        %v743 = vand.u32 %v353, 4294901760
        %v744 = vsub.f32 %v353, %v743
        %v745 = vand.u32 %v744, 4294901760
        %v746 = vsub.f32 %v744, %v745
        %v747 = vand.u32 %v746, 4294901760
        %748 = vmatmul.mubr.f32.gmra.mrb[0].mxu0 %v747
        %v749 = vpop.f32.mrb[0].mxu0
        %v750 = vadd.f32 0.0, %v749
        %v751 = vpop.f32.mrb[0].mxu0
        %752 = vmatprep.mubr.f32.mxu0 0.0
        %v753 = vand.u32 %v354, 4294901760
        %v754 = vsub.f32 %v354, %v753
        %v755 = vand.u32 %v754, 4294901760
        %v756 = vsub.f32 %v754, %v755
        %v757 = vand.u32 %v756, 4294901760
        %758 = vmatmul.mubr.f32.gmra.mrb[0].mxu0 %v757
        %v759 = vpop.f32.mrb[0].mxu0
        %v760 = vadd.f32 0.0, %v759
        %v761 = vpop.f32.mrb[0].mxu0
        %762 = vmatprep.mubr.f32.mxu0 0.0
        %v763 = vand.u32 %v355, 4294901760
        %v764 = vsub.f32 %v355, %v763
        %v765 = vand.u32 %v764, 4294901760
        %v766 = vsub.f32 %v764, %v765
        %v767 = vand.u32 %v766, 4294901760
        %768 = vmatmul.mubr.f32.gmra.mrb[0].mxu0 %v767
        %v769 = vpop.f32.mrb[0].mxu0
        %v770 = vadd.f32 0.0, %v769
        %v771 = vpop.f32.mrb[0].mxu0
        %772 = vdwg.mxu0
        %773 = vmatprep.subr.mxu0 0.0
        %v774 = vand.u32 %v356, 4294901760
        %v775 = vsub.f32 %v356, %v774
        %v776 = vand.u32 %v775, 4294901760
        %v777 = vsub.f32 %v775, %v776
        %v778 = vand.u32 %v777, 4294901760
        %779 = vmatpush1.msra.mxu0 %v778
        %780 = vmatprep.subr.mxu0 0.0
        %v781 = vand.u32 %v357, 4294901760
        %v782 = vsub.f32 %v357, %v781
        %v783 = vand.u32 %v782, 4294901760
        %v784 = vsub.f32 %v782, %v783
        %v785 = vand.u32 %v784, 4294901760
        %786 = vmatpush1.msra.mxu0 %v785
        %787 = vmatprep.subr.mxu0 0.0
        %v788 = vand.u32 %v358, 4294901760
        %v789 = vsub.f32 %v358, %v788
        %v790 = vand.u32 %v789, 4294901760
        %v791 = vsub.f32 %v789, %v790
        %v792 = vand.u32 %v791, 4294901760
        %793 = vmatpush1.msra.mxu0 %v792
        %794 = vmatprep.subr.mxu0 0.0
        %v795 = vand.u32 %v359, 4294901760
        %v796 = vsub.f32 %v359, %v795
        %v797 = vand.u32 %v796, 4294901760
        %v798 = vsub.f32 %v796, %v797
        %v799 = vand.u32 %v798, 4294901760
        %800 = vmatpush1.msra.mxu0 %v799
        %801 = vmatprep.subr.mxu0 0.0
        %v802 = vand.u32 %v360, 4294901760
        %v803 = vsub.f32 %v360, %v802
        %v804 = vand.u32 %v803, 4294901760
        %v805 = vsub.f32 %v803, %v804
        %v806 = vand.u32 %v805, 4294901760
        %807 = vmatpush1.msra.mxu0 %v806
        %808 = vmatprep.subr.mxu0 0.0
        %v809 = vand.u32 %v361, 4294901760
        %v810 = vsub.f32 %v361, %v809
        %v811 = vand.u32 %v810, 4294901760
        %v812 = vsub.f32 %v810, %v811
        %v813 = vand.u32 %v812, 4294901760
        %814 = vmatpush1.msra.mxu0 %v813
        %815 = vmatprep.subr.mxu0 0.0
        %v816 = vand.u32 %v362, 4294901760
        %v817 = vsub.f32 %v362, %v816
        %v818 = vand.u32 %v817, 4294901760
        %v819 = vsub.f32 %v817, %v818
        %v820 = vand.u32 %v819, 4294901760
        %821 = vmatpush1.msra.mxu0 %v820
        %822 = vmatprep.subr.mxu0 0.0
        %v823 = vand.u32 %v363, 4294901760
        %v824 = vsub.f32 %v363, %v823
        %v825 = vand.u32 %v824, 4294901760
        %v826 = vsub.f32 %v824, %v825
        %v827 = vand.u32 %v826, 4294901760
        %828 = vmatpush1.msra.mxu0 %v827
        %829 = vmatprep.subr.mxu0 0.0
        %v830 = vand.u32 %v364, 4294901760
        %v831 = vsub.f32 %v364, %v830
        %v832 = vand.u32 %v831, 4294901760
        %v833 = vsub.f32 %v831, %v832
        %v834 = vand.u32 %v833, 4294901760
        %835 = vmatpush1.msra.mxu0 %v834
        %836 = vmatprep.subr.mxu0 0.0
        %v837 = vand.u32 %v365, 4294901760
        %v838 = vsub.f32 %v365, %v837
        %v839 = vand.u32 %v838, 4294901760
        %v840 = vsub.f32 %v838, %v839
        %v841 = vand.u32 %v840, 4294901760
        %842 = vmatpush1.msra.mxu0 %v841
        %843 = vmatprep.subr.mxu0 0.0
        %v844 = vand.u32 %v366, 4294901760
        %v845 = vsub.f32 %v366, %v844
        %v846 = vand.u32 %v845, 4294901760
        %v847 = vsub.f32 %v845, %v846
        %v848 = vand.u32 %v847, 4294901760
        %849 = vmatpush1.msra.mxu0 %v848
        %850 = vmatprep.subr.mxu0 0.0
        %v851 = vand.u32 %v367, 4294901760
        %v852 = vsub.f32 %v367, %v851
        %v853 = vand.u32 %v852, 4294901760
        %v854 = vsub.f32 %v852, %v853
        %v855 = vand.u32 %v854, 4294901760
        %856 = vmatpush1.msra.mxu0 %v855
        %857 = vmatprep.subr.mxu0 0.0
        %v858 = vand.u32 %v368, 4294901760
        %v859 = vsub.f32 %v368, %v858
        %v860 = vand.u32 %v859, 4294901760
        %v861 = vsub.f32 %v859, %v860
        %v862 = vand.u32 %v861, 4294901760
        %863 = vmatpush1.msra.mxu0 %v862
        %864 = vmatprep.subr.mxu0 0.0
        %v865 = vand.u32 %v369, 4294901760
        %v866 = vsub.f32 %v369, %v865
        %v867 = vand.u32 %v866, 4294901760
        %v868 = vsub.f32 %v866, %v867
        %v869 = vand.u32 %v868, 4294901760
        %870 = vmatpush1.msra.mxu0 %v869
        %871 = vmatprep.subr.mxu0 0.0
        %v872 = vand.u32 %v370, 4294901760
        %v873 = vsub.f32 %v370, %v872
        %v874 = vand.u32 %v873, 4294901760
        %v875 = vsub.f32 %v873, %v874
        %v876 = vand.u32 %v875, 4294901760
        %877 = vmatpush1.msra.mxu0 %v876
        %878 = vmatprep.subr.mxu0 0.0
        %v879 = vand.u32 %v371, 4294901760
        %v880 = vsub.f32 %v371, %v879
        %v881 = vand.u32 %v880, 4294901760
        %v882 = vsub.f32 %v880, %v881
        %v883 = vand.u32 %v882, 4294901760
        %884 = vmatpush1.msra.mxu0 %v883
        %885 = vmatprep.subr.mxu0 0.0
        %886 = vmatpush1.msra.mxu0 0.0
        %887 = vmatprep.subr.mxu0 0.0
        %888 = vmatpush1.msra.mxu0 0.0
        %889 = vmatprep.subr.mxu0 0.0
        %890 = vmatpush1.msra.mxu0 0.0
        %891 = vmatprep.subr.mxu0 0.0
        %892 = vmatpush1.msra.mxu0 0.0
        %893 = vmatprep.subr.mxu0 0.0
        %894 = vmatpush1.msra.mxu0 0.0
        %895 = vmatprep.subr.mxu0 0.0
        %896 = vmatpush1.msra.mxu0 0.0
        %897 = vmatprep.subr.mxu0 0.0
        %898 = vmatpush1.msra.mxu0 0.0
        %899 = vmatprep.subr.mxu0 0.0
        %900 = vmatpush1.msra.mxu0 0.0
        %901 = vmatprep.subr.mxu0 0.0
        %902 = vmatpush1.msra.mxu0 0.0
        %903 = vmatprep.subr.mxu0 0.0
        %904 = vmatpush1.msra.mxu0 0.0
        %905 = vmatprep.subr.mxu0 0.0
        %906 = vmatpush1.msra.mxu0 0.0
        %907 = vmatprep.subr.mxu0 0.0
        %908 = vmatpush1.msra.mxu0 0.0
        %909 = vmatprep.subr.mxu0 0.0
        %910 = vmatpush1.msra.mxu0 0.0
        %911 = vmatprep.subr.mxu0 0.0
        %912 = vmatpush1.msra.mxu0 0.0
        %913 = vmatprep.subr.mxu0 0.0
        %914 = vmatpush1.msra.mxu0 0.0
        %915 = vmatprep.subr.mxu0 0.0
        %916 = vmatpush1.msra.mxu0 0.0
        %917 = vmatprep.mubr.f32.mxu0 0.0
        %v918 = vand.u32 %v324, 4294901760
        %919 = vmatmul.mubr.f32.gmra.mrb[0].mxu0 %v918
        %v920 = vpop.f32.mrb[0].mxu0
        %v921 = vadd.f32 %v460, %v920
        %v922 = vpop.f32.mrb[0].mxu0
        %923 = vmatprep.mubr.f32.mxu0 0.0
        %v924 = vand.u32 %v325, 4294901760
        %925 = vmatmul.mubr.f32.gmra.mrb[0].mxu0 %v924
        %v926 = vpop.f32.mrb[0].mxu0
        %v927 = vadd.f32 %v470, %v926
        %v928 = vpop.f32.mrb[0].mxu0
        %929 = vmatprep.mubr.f32.mxu0 0.0
        %v930 = vand.u32 %v326, 4294901760
        %931 = vmatmul.mubr.f32.gmra.mrb[0].mxu0 %v930
        %v932 = vpop.f32.mrb[0].mxu0
        %v933 = vadd.f32 %v480, %v932
        %v934 = vpop.f32.mrb[0].mxu0
        %935 = vmatprep.mubr.f32.mxu0 0.0
        %v936 = vand.u32 %v327, 4294901760
        %937 = vmatmul.mubr.f32.gmra.mrb[0].mxu0 %v936
        %v938 = vpop.f32.mrb[0].mxu0
        %v939 = vadd.f32 %v490, %v938
        %v940 = vpop.f32.mrb[0].mxu0
        %941 = vmatprep.mubr.f32.mxu0 0.0
        %v942 = vand.u32 %v328, 4294901760
        %943 = vmatmul.mubr.f32.gmra.mrb[0].mxu0 %v942
        %v944 = vpop.f32.mrb[0].mxu0
        %v945 = vadd.f32 %v500, %v944
        %v946 = vpop.f32.mrb[0].mxu0
        %947 = vmatprep.mubr.f32.mxu0 0.0
        %v948 = vand.u32 %v329, 4294901760
        %949 = vmatmul.mubr.f32.gmra.mrb[0].mxu0 %v948
        %v950 = vpop.f32.mrb[0].mxu0
        %v951 = vadd.f32 %v510, %v950
        %v952 = vpop.f32.mrb[0].mxu0
        %953 = vmatprep.mubr.f32.mxu0 0.0
        %v954 = vand.u32 %v330, 4294901760
        %955 = vmatmul.mubr.f32.gmra.mrb[0].mxu0 %v954
        %v956 = vpop.f32.mrb[0].mxu0
        %v957 = vadd.f32 %v520, %v956
        %v958 = vpop.f32.mrb[0].mxu0
        %959 = vmatprep.mubr.f32.mxu0 0.0
        %v960 = vand.u32 %v331, 4294901760
        %961 = vmatmul.mubr.f32.gmra.mrb[0].mxu0 %v960
        %v962 = vpop.f32.mrb[0].mxu0
        %v963 = vadd.f32 %v530, %v962
        %v964 = vpop.f32.mrb[0].mxu0
        %965 = vmatprep.mubr.f32.mxu0 0.0
        %v966 = vand.u32 %v332, 4294901760
        %967 = vmatmul.mubr.f32.gmra.mrb[0].mxu0 %v966
        %v968 = vpop.f32.mrb[0].mxu0
        %v969 = vadd.f32 %v540, %v968
        %v970 = vpop.f32.mrb[0].mxu0
        %971 = vmatprep.mubr.f32.mxu0 0.0
        %v972 = vand.u32 %v333, 4294901760
        %973 = vmatmul.mubr.f32.gmra.mrb[0].mxu0 %v972
        %v974 = vpop.f32.mrb[0].mxu0
        %v975 = vadd.f32 %v550, %v974
        %v976 = vpop.f32.mrb[0].mxu0
        %977 = vmatprep.mubr.f32.mxu0 0.0
        %v978 = vand.u32 %v334, 4294901760
        %979 = vmatmul.mubr.f32.gmra.mrb[0].mxu0 %v978
        %v980 = vpop.f32.mrb[0].mxu0
        %v981 = vadd.f32 %v560, %v980
        %v982 = vpop.f32.mrb[0].mxu0
        %983 = vmatprep.mubr.f32.mxu0 0.0
        %v984 = vand.u32 %v335, 4294901760
        %985 = vmatmul.mubr.f32.gmra.mrb[0].mxu0 %v984
        %v986 = vpop.f32.mrb[0].mxu0
        %v987 = vadd.f32 %v570, %v986
        %v988 = vpop.f32.mrb[0].mxu0
        %989 = vmatprep.mubr.f32.mxu0 0.0
        %v990 = vand.u32 %v336, 4294901760
        %991 = vmatmul.mubr.f32.gmra.mrb[0].mxu0 %v990
        %v992 = vpop.f32.mrb[0].mxu0
        %v993 = vadd.f32 %v580, %v992
        %v994 = vpop.f32.mrb[0].mxu0
        %995 = vmatprep.mubr.f32.mxu0 0.0
        %v996 = vand.u32 %v337, 4294901760
        %997 = vmatmul.mubr.f32.gmra.mrb[0].mxu0 %v996
        %v998 = vpop.f32.mrb[0].mxu0
        %v999 = vadd.f32 %v590, %v998
        %v1000 = vpop.f32.mrb[0].mxu0
        %1001 = vmatprep.mubr.f32.mxu0 0.0
        %v1002 = vand.u32 %v338, 4294901760
        %1003 = vmatmul.mubr.f32.gmra.mrb[0].mxu0 %v1002
        %v1004 = vpop.f32.mrb[0].mxu0
        %v1005 = vadd.f32 %v600, %v1004
        %v1006 = vpop.f32.mrb[0].mxu0
        %1007 = vmatprep.mubr.f32.mxu0 0.0
        %v1008 = vand.u32 %v339, 4294901760
        %1009 = vmatmul.mubr.f32.gmra.mrb[0].mxu0 %v1008
        %v1010 = vpop.f32.mrb[0].mxu0
        %v1011 = vadd.f32 %v610, %v1010
        %v1012 = vpop.f32.mrb[0].mxu0
        %1013 = vmatprep.mubr.f32.mxu0 0.0
        %v1014 = vand.u32 %v340, 4294901760
        %1015 = vmatmul.mubr.f32.gmra.mrb[0].mxu0 %v1014
        %v1016 = vpop.f32.mrb[0].mxu0
        %v1017 = vadd.f32 %v620, %v1016
        %v1018 = vpop.f32.mrb[0].mxu0
        %1019 = vmatprep.mubr.f32.mxu0 0.0
        %v1020 = vand.u32 %v341, 4294901760
        %1021 = vmatmul.mubr.f32.gmra.mrb[0].mxu0 %v1020
        %v1022 = vpop.f32.mrb[0].mxu0
        %v1023 = vadd.f32 %v630, %v1022
        %v1024 = vpop.f32.mrb[0].mxu0
        %1025 = vmatprep.mubr.f32.mxu0 0.0
        %v1026 = vand.u32 %v342, 4294901760
        %1027 = vmatmul.mubr.f32.gmra.mrb[0].mxu0 %v1026
        %v1028 = vpop.f32.mrb[0].mxu0
        %v1029 = vadd.f32 %v640, %v1028
        %v1030 = vpop.f32.mrb[0].mxu0
        %1031 = vmatprep.mubr.f32.mxu0 0.0
        %v1032 = vand.u32 %v343, 4294901760
        %1033 = vmatmul.mubr.f32.gmra.mrb[0].mxu0 %v1032
        %v1034 = vpop.f32.mrb[0].mxu0
        %v1035 = vadd.f32 %v650, %v1034
        %v1036 = vpop.f32.mrb[0].mxu0
        %1037 = vmatprep.mubr.f32.mxu0 0.0
        %v1038 = vand.u32 %v344, 4294901760
        %1039 = vmatmul.mubr.f32.gmra.mrb[0].mxu0 %v1038
        %v1040 = vpop.f32.mrb[0].mxu0
        %v1041 = vadd.f32 %v660, %v1040
        %v1042 = vpop.f32.mrb[0].mxu0
        %1043 = vmatprep.mubr.f32.mxu0 0.0
        %v1044 = vand.u32 %v345, 4294901760
        %1045 = vmatmul.mubr.f32.gmra.mrb[0].mxu0 %v1044
        %v1046 = vpop.f32.mrb[0].mxu0
        %v1047 = vadd.f32 %v670, %v1046
        %v1048 = vpop.f32.mrb[0].mxu0
        %1049 = vmatprep.mubr.f32.mxu0 0.0
        %v1050 = vand.u32 %v346, 4294901760
        %1051 = vmatmul.mubr.f32.gmra.mrb[0].mxu0 %v1050
        %v1052 = vpop.f32.mrb[0].mxu0
        %v1053 = vadd.f32 %v680, %v1052
        %v1054 = vpop.f32.mrb[0].mxu0
        %1055 = vmatprep.mubr.f32.mxu0 0.0
        %v1056 = vand.u32 %v347, 4294901760
        %1057 = vmatmul.mubr.f32.gmra.mrb[0].mxu0 %v1056
        %v1058 = vpop.f32.mrb[0].mxu0
        %v1059 = vadd.f32 %v690, %v1058
        %v1060 = vpop.f32.mrb[0].mxu0
        %1061 = vmatprep.mubr.f32.mxu0 0.0
        %v1062 = vand.u32 %v348, 4294901760
        %1063 = vmatmul.mubr.f32.gmra.mrb[0].mxu0 %v1062
        %v1064 = vpop.f32.mrb[0].mxu0
        %v1065 = vadd.f32 %v700, %v1064
        %v1066 = vpop.f32.mrb[0].mxu0
        %1067 = vmatprep.mubr.f32.mxu0 0.0
        %v1068 = vand.u32 %v349, 4294901760
        %1069 = vmatmul.mubr.f32.gmra.mrb[0].mxu0 %v1068
        %v1070 = vpop.f32.mrb[0].mxu0
        %v1071 = vadd.f32 %v710, %v1070
        %v1072 = vpop.f32.mrb[0].mxu0
        %1073 = vmatprep.mubr.f32.mxu0 0.0
        %v1074 = vand.u32 %v350, 4294901760
        %1075 = vmatmul.mubr.f32.gmra.mrb[0].mxu0 %v1074
        %v1076 = vpop.f32.mrb[0].mxu0
        %v1077 = vadd.f32 %v720, %v1076
        %v1078 = vpop.f32.mrb[0].mxu0
        %1079 = vmatprep.mubr.f32.mxu0 0.0
        %v1080 = vand.u32 %v351, 4294901760
        %1081 = vmatmul.mubr.f32.gmra.mrb[0].mxu0 %v1080
        %v1082 = vpop.f32.mrb[0].mxu0
        %v1083 = vadd.f32 %v730, %v1082
        %v1084 = vpop.f32.mrb[0].mxu0
        %1085 = vmatprep.mubr.f32.mxu0 0.0
        %v1086 = vand.u32 %v352, 4294901760
        %1087 = vmatmul.mubr.f32.gmra.mrb[0].mxu0 %v1086
        %v1088 = vpop.f32.mrb[0].mxu0
        %v1089 = vadd.f32 %v740, %v1088
        %v1090 = vpop.f32.mrb[0].mxu0
        %1091 = vmatprep.mubr.f32.mxu0 0.0
        %v1092 = vand.u32 %v353, 4294901760
        %1093 = vmatmul.mubr.f32.gmra.mrb[0].mxu0 %v1092
        %v1094 = vpop.f32.mrb[0].mxu0
        %v1095 = vadd.f32 %v750, %v1094
        %v1096 = vpop.f32.mrb[0].mxu0
        %1097 = vmatprep.mubr.f32.mxu0 0.0
        %v1098 = vand.u32 %v354, 4294901760
        %1099 = vmatmul.mubr.f32.gmra.mrb[0].mxu0 %v1098
        %v1100 = vpop.f32.mrb[0].mxu0
        %v1101 = vadd.f32 %v760, %v1100
        %v1102 = vpop.f32.mrb[0].mxu0
        %1103 = vmatprep.mubr.f32.mxu0 0.0
        %v1104 = vand.u32 %v355, 4294901760
        %1105 = vmatmul.mubr.f32.gmra.mrb[0].mxu0 %v1104
        %v1106 = vpop.f32.mrb[0].mxu0
        %v1107 = vadd.f32 %v770, %v1106
        %v1108 = vpop.f32.mrb[0].mxu0
        %1109 = vdwg.mxu0
        %1110 = vmatprep.subr.mxu0 0.0
        %v1111 = vand.u32 %v356, 4294901760
        %v1112 = vsub.f32 %v356, %v1111
        %1113 = vmatpush1.msra.mxu0 %v1112
        %1114 = vmatprep.subr.mxu0 0.0
        %v1115 = vand.u32 %v357, 4294901760
        %v1116 = vsub.f32 %v357, %v1115
        %1117 = vmatpush1.msra.mxu0 %v1116
        %1118 = vmatprep.subr.mxu0 0.0
        %v1119 = vand.u32 %v358, 4294901760
        %v1120 = vsub.f32 %v358, %v1119
        %1121 = vmatpush1.msra.mxu0 %v1120
        %1122 = vmatprep.subr.mxu0 0.0
        %v1123 = vand.u32 %v359, 4294901760
        %v1124 = vsub.f32 %v359, %v1123
        %1125 = vmatpush1.msra.mxu0 %v1124
        %1126 = vmatprep.subr.mxu0 0.0
        %v1127 = vand.u32 %v360, 4294901760
        %v1128 = vsub.f32 %v360, %v1127
        %1129 = vmatpush1.msra.mxu0 %v1128
        %1130 = vmatprep.subr.mxu0 0.0
        %v1131 = vand.u32 %v361, 4294901760
        %v1132 = vsub.f32 %v361, %v1131
        %1133 = vmatpush1.msra.mxu0 %v1132
        %1134 = vmatprep.subr.mxu0 0.0
        %v1135 = vand.u32 %v362, 4294901760
        %v1136 = vsub.f32 %v362, %v1135
        %1137 = vmatpush1.msra.mxu0 %v1136
        %1138 = vmatprep.subr.mxu0 0.0
        %v1139 = vand.u32 %v363, 4294901760
        %v1140 = vsub.f32 %v363, %v1139
        %1141 = vmatpush1.msra.mxu0 %v1140
        %1142 = vmatprep.subr.mxu0 0.0
        %v1143 = vand.u32 %v364, 4294901760
        %v1144 = vsub.f32 %v364, %v1143
        %1145 = vmatpush1.msra.mxu0 %v1144
        %1146 = vmatprep.subr.mxu0 0.0
        %v1147 = vand.u32 %v365, 4294901760
        %v1148 = vsub.f32 %v365, %v1147
        %1149 = vmatpush1.msra.mxu0 %v1148
        %1150 = vmatprep.subr.mxu0 0.0
        %v1151 = vand.u32 %v366, 4294901760
        %v1152 = vsub.f32 %v366, %v1151
        %1153 = vmatpush1.msra.mxu0 %v1152
        %1154 = vmatprep.subr.mxu0 0.0
        %v1155 = vand.u32 %v367, 4294901760
        %v1156 = vsub.f32 %v367, %v1155
        %1157 = vmatpush1.msra.mxu0 %v1156
        %1158 = vmatprep.subr.mxu0 0.0
        %v1159 = vand.u32 %v368, 4294901760
        %v1160 = vsub.f32 %v368, %v1159
        %1161 = vmatpush1.msra.mxu0 %v1160
        %1162 = vmatprep.subr.mxu0 0.0
        %v1163 = vand.u32 %v369, 4294901760
        %v1164 = vsub.f32 %v369, %v1163
        %1165 = vmatpush1.msra.mxu0 %v1164
        %1166 = vmatprep.subr.mxu0 0.0
        %v1167 = vand.u32 %v370, 4294901760
        %v1168 = vsub.f32 %v370, %v1167
        %1169 = vmatpush1.msra.mxu0 %v1168
        %1170 = vmatprep.subr.mxu0 0.0
        %v1171 = vand.u32 %v371, 4294901760
        %v1172 = vsub.f32 %v371, %v1171
        %1173 = vmatpush1.msra.mxu0 %v1172
        %1174 = vmatprep.subr.mxu0 0.0
        %1175 = vmatpush1.msra.mxu0 0.0
        %1176 = vmatprep.subr.mxu0 0.0
        %1177 = vmatpush1.msra.mxu0 0.0
        %1178 = vmatprep.subr.mxu0 0.0
        %1179 = vmatpush1.msra.mxu0 0.0
        %1180 = vmatprep.subr.mxu0 0.0
        %1181 = vmatpush1.msra.mxu0 0.0
        %1182 = vmatprep.subr.mxu0 0.0
        %1183 = vmatpush1.msra.mxu0 0.0
        %1184 = vmatprep.subr.mxu0 0.0
        %1185 = vmatpush1.msra.mxu0 0.0
        %1186 = vmatprep.subr.mxu0 0.0
        %1187 = vmatpush1.msra.mxu0 0.0
        %1188 = vmatprep.subr.mxu0 0.0
        %1189 = vmatpush1.msra.mxu0 0.0
        %1190 = vmatprep.subr.mxu0 0.0
        %1191 = vmatpush1.msra.mxu0 0.0
        %1192 = vmatprep.subr.mxu0 0.0
        %1193 = vmatpush1.msra.mxu0 0.0
        %1194 = vmatprep.subr.mxu0 0.0
        %1195 = vmatpush1.msra.mxu0 0.0
        %1196 = vmatprep.subr.mxu0 0.0
        %1197 = vmatpush1.msra.mxu0 0.0
        %1198 = vmatprep.subr.mxu0 0.0
        %1199 = vmatpush1.msra.mxu0 0.0
        %1200 = vmatprep.subr.mxu0 0.0
        %1201 = vmatpush1.msra.mxu0 0.0
        %1202 = vmatprep.subr.mxu0 0.0
        %1203 = vmatpush1.msra.mxu0 0.0
        %1204 = vmatprep.subr.mxu0 0.0
        %1205 = vmatpush1.msra.mxu0 0.0
        %1206 = vmatprep.mubr.f32.mxu0 0.0
        %v1207 = vand.u32 %v324, 4294901760
        %v1208 = vsub.f32 %v324, %v1207
        %1209 = vmatmul.mubr.f32.gmra.mrb[0].mxu0 %v1208
        %v1210 = vpop.f32.mrb[0].mxu0
        %v1211 = vadd.f32 %v921, %v1210
        %v1212 = vpop.f32.mrb[0].mxu0
        %1213 = vmatprep.mubr.f32.mxu0 0.0
        %v1214 = vand.u32 %v325, 4294901760
        %v1215 = vsub.f32 %v325, %v1214
        %1216 = vmatmul.mubr.f32.gmra.mrb[0].mxu0 %v1215
        %v1217 = vpop.f32.mrb[0].mxu0
        %v1218 = vadd.f32 %v927, %v1217
        %v1219 = vpop.f32.mrb[0].mxu0
        %1220 = vmatprep.mubr.f32.mxu0 0.0
        %v1221 = vand.u32 %v326, 4294901760
        %v1222 = vsub.f32 %v326, %v1221
        %1223 = vmatmul.mubr.f32.gmra.mrb[0].mxu0 %v1222
        %v1224 = vpop.f32.mrb[0].mxu0
        %v1225 = vadd.f32 %v933, %v1224
        %v1226 = vpop.f32.mrb[0].mxu0
        %1227 = vmatprep.mubr.f32.mxu0 0.0
        %v1228 = vand.u32 %v327, 4294901760
        %v1229 = vsub.f32 %v327, %v1228
        %1230 = vmatmul.mubr.f32.gmra.mrb[0].mxu0 %v1229
        %v1231 = vpop.f32.mrb[0].mxu0
        %v1232 = vadd.f32 %v939, %v1231
        %v1233 = vpop.f32.mrb[0].mxu0
        %1234 = vmatprep.mubr.f32.mxu0 0.0
        %v1235 = vand.u32 %v328, 4294901760
        %v1236 = vsub.f32 %v328, %v1235
        %1237 = vmatmul.mubr.f32.gmra.mrb[0].mxu0 %v1236
        %v1238 = vpop.f32.mrb[0].mxu0
        %v1239 = vadd.f32 %v945, %v1238
        %v1240 = vpop.f32.mrb[0].mxu0
        %1241 = vmatprep.mubr.f32.mxu0 0.0
        %v1242 = vand.u32 %v329, 4294901760
        %v1243 = vsub.f32 %v329, %v1242
        %1244 = vmatmul.mubr.f32.gmra.mrb[0].mxu0 %v1243
        %v1245 = vpop.f32.mrb[0].mxu0
        %v1246 = vadd.f32 %v951, %v1245
        %v1247 = vpop.f32.mrb[0].mxu0
        %1248 = vmatprep.mubr.f32.mxu0 0.0
        %v1249 = vand.u32 %v330, 4294901760
        %v1250 = vsub.f32 %v330, %v1249
        %1251 = vmatmul.mubr.f32.gmra.mrb[0].mxu0 %v1250
        %v1252 = vpop.f32.mrb[0].mxu0
        %v1253 = vadd.f32 %v957, %v1252
        %v1254 = vpop.f32.mrb[0].mxu0
        %1255 = vmatprep.mubr.f32.mxu0 0.0
        %v1256 = vand.u32 %v331, 4294901760
        %v1257 = vsub.f32 %v331, %v1256
        %1258 = vmatmul.mubr.f32.gmra.mrb[0].mxu0 %v1257
        %v1259 = vpop.f32.mrb[0].mxu0
        %v1260 = vadd.f32 %v963, %v1259
        %v1261 = vpop.f32.mrb[0].mxu0
        %1262 = vmatprep.mubr.f32.mxu0 0.0
        %v1263 = vand.u32 %v332, 4294901760
        %v1264 = vsub.f32 %v332, %v1263
        %1265 = vmatmul.mubr.f32.gmra.mrb[0].mxu0 %v1264
        %v1266 = vpop.f32.mrb[0].mxu0
        %v1267 = vadd.f32 %v969, %v1266
        %v1268 = vpop.f32.mrb[0].mxu0
        %1269 = vmatprep.mubr.f32.mxu0 0.0
        %v1270 = vand.u32 %v333, 4294901760
        %v1271 = vsub.f32 %v333, %v1270
        %1272 = vmatmul.mubr.f32.gmra.mrb[0].mxu0 %v1271
        %v1273 = vpop.f32.mrb[0].mxu0
        %v1274 = vadd.f32 %v975, %v1273
        %v1275 = vpop.f32.mrb[0].mxu0
        %1276 = vmatprep.mubr.f32.mxu0 0.0
        %v1277 = vand.u32 %v334, 4294901760
        %v1278 = vsub.f32 %v334, %v1277
        %1279 = vmatmul.mubr.f32.gmra.mrb[0].mxu0 %v1278
        %v1280 = vpop.f32.mrb[0].mxu0
        %v1281 = vadd.f32 %v981, %v1280
        %v1282 = vpop.f32.mrb[0].mxu0
        %1283 = vmatprep.mubr.f32.mxu0 0.0
        %v1284 = vand.u32 %v335, 4294901760
        %v1285 = vsub.f32 %v335, %v1284
        %1286 = vmatmul.mubr.f32.gmra.mrb[0].mxu0 %v1285
        %v1287 = vpop.f32.mrb[0].mxu0
        %v1288 = vadd.f32 %v987, %v1287
        %v1289 = vpop.f32.mrb[0].mxu0
        %1290 = vmatprep.mubr.f32.mxu0 0.0
        %v1291 = vand.u32 %v336, 4294901760
        %v1292 = vsub.f32 %v336, %v1291
        %1293 = vmatmul.mubr.f32.gmra.mrb[0].mxu0 %v1292
        %v1294 = vpop.f32.mrb[0].mxu0
        %v1295 = vadd.f32 %v993, %v1294
        %v1296 = vpop.f32.mrb[0].mxu0
        %1297 = vmatprep.mubr.f32.mxu0 0.0
        %v1298 = vand.u32 %v337, 4294901760
        %v1299 = vsub.f32 %v337, %v1298
        %1300 = vmatmul.mubr.f32.gmra.mrb[0].mxu0 %v1299
        %v1301 = vpop.f32.mrb[0].mxu0
        %v1302 = vadd.f32 %v999, %v1301
        %v1303 = vpop.f32.mrb[0].mxu0
        %1304 = vmatprep.mubr.f32.mxu0 0.0
        %v1305 = vand.u32 %v338, 4294901760
        %v1306 = vsub.f32 %v338, %v1305
        %1307 = vmatmul.mubr.f32.gmra.mrb[0].mxu0 %v1306
        %v1308 = vpop.f32.mrb[0].mxu0
        %v1309 = vadd.f32 %v1005, %v1308
        %v1310 = vpop.f32.mrb[0].mxu0
        %1311 = vmatprep.mubr.f32.mxu0 0.0
        %v1312 = vand.u32 %v339, 4294901760
        %v1313 = vsub.f32 %v339, %v1312
        %1314 = vmatmul.mubr.f32.gmra.mrb[0].mxu0 %v1313
        %v1315 = vpop.f32.mrb[0].mxu0
        %v1316 = vadd.f32 %v1011, %v1315
        %v1317 = vpop.f32.mrb[0].mxu0
        %1318 = vmatprep.mubr.f32.mxu0 0.0
        %v1319 = vand.u32 %v340, 4294901760
        %v1320 = vsub.f32 %v340, %v1319
        %1321 = vmatmul.mubr.f32.gmra.mrb[0].mxu0 %v1320
        %v1322 = vpop.f32.mrb[0].mxu0
        %v1323 = vadd.f32 %v1017, %v1322
        %v1324 = vpop.f32.mrb[0].mxu0
        %1325 = vmatprep.mubr.f32.mxu0 0.0
        %v1326 = vand.u32 %v341, 4294901760
        %v1327 = vsub.f32 %v341, %v1326
        %1328 = vmatmul.mubr.f32.gmra.mrb[0].mxu0 %v1327
        %v1329 = vpop.f32.mrb[0].mxu0
        %v1330 = vadd.f32 %v1023, %v1329
        %v1331 = vpop.f32.mrb[0].mxu0
        %1332 = vmatprep.mubr.f32.mxu0 0.0
        %v1333 = vand.u32 %v342, 4294901760
        %v1334 = vsub.f32 %v342, %v1333
        %1335 = vmatmul.mubr.f32.gmra.mrb[0].mxu0 %v1334
        %v1336 = vpop.f32.mrb[0].mxu0
        %v1337 = vadd.f32 %v1029, %v1336
        %v1338 = vpop.f32.mrb[0].mxu0
        %1339 = vmatprep.mubr.f32.mxu0 0.0
        %v1340 = vand.u32 %v343, 4294901760
        %v1341 = vsub.f32 %v343, %v1340
        %1342 = vmatmul.mubr.f32.gmra.mrb[0].mxu0 %v1341
        %v1343 = vpop.f32.mrb[0].mxu0
        %v1344 = vadd.f32 %v1035, %v1343
        %v1345 = vpop.f32.mrb[0].mxu0
        %1346 = vmatprep.mubr.f32.mxu0 0.0
        %v1347 = vand.u32 %v344, 4294901760
        %v1348 = vsub.f32 %v344, %v1347
        %1349 = vmatmul.mubr.f32.gmra.mrb[0].mxu0 %v1348
        %v1350 = vpop.f32.mrb[0].mxu0
        %v1351 = vadd.f32 %v1041, %v1350
        %v1352 = vpop.f32.mrb[0].mxu0
        %1353 = vmatprep.mubr.f32.mxu0 0.0
        %v1354 = vand.u32 %v345, 4294901760
        %v1355 = vsub.f32 %v345, %v1354
        %1356 = vmatmul.mubr.f32.gmra.mrb[0].mxu0 %v1355
        %v1357 = vpop.f32.mrb[0].mxu0
        %v1358 = vadd.f32 %v1047, %v1357
        %v1359 = vpop.f32.mrb[0].mxu0
        %1360 = vmatprep.mubr.f32.mxu0 0.0
        %v1361 = vand.u32 %v346, 4294901760
        %v1362 = vsub.f32 %v346, %v1361
        %1363 = vmatmul.mubr.f32.gmra.mrb[0].mxu0 %v1362
        %v1364 = vpop.f32.mrb[0].mxu0
        %v1365 = vadd.f32 %v1053, %v1364
        %v1366 = vpop.f32.mrb[0].mxu0
        %1367 = vmatprep.mubr.f32.mxu0 0.0
        %v1368 = vand.u32 %v347, 4294901760
        %v1369 = vsub.f32 %v347, %v1368
        %1370 = vmatmul.mubr.f32.gmra.mrb[0].mxu0 %v1369
        %v1371 = vpop.f32.mrb[0].mxu0
        %v1372 = vadd.f32 %v1059, %v1371
        %v1373 = vpop.f32.mrb[0].mxu0
        %1374 = vmatprep.mubr.f32.mxu0 0.0
        %v1375 = vand.u32 %v348, 4294901760
        %v1376 = vsub.f32 %v348, %v1375
        %1377 = vmatmul.mubr.f32.gmra.mrb[0].mxu0 %v1376
        %v1378 = vpop.f32.mrb[0].mxu0
        %v1379 = vadd.f32 %v1065, %v1378
        %v1380 = vpop.f32.mrb[0].mxu0
        %1381 = vmatprep.mubr.f32.mxu0 0.0
        %v1382 = vand.u32 %v349, 4294901760
        %v1383 = vsub.f32 %v349, %v1382
        %1384 = vmatmul.mubr.f32.gmra.mrb[0].mxu0 %v1383
        %v1385 = vpop.f32.mrb[0].mxu0
        %v1386 = vadd.f32 %v1071, %v1385
        %v1387 = vpop.f32.mrb[0].mxu0
        %1388 = vmatprep.mubr.f32.mxu0 0.0
        %v1389 = vand.u32 %v350, 4294901760
        %v1390 = vsub.f32 %v350, %v1389
        %1391 = vmatmul.mubr.f32.gmra.mrb[0].mxu0 %v1390
        %v1392 = vpop.f32.mrb[0].mxu0
        %v1393 = vadd.f32 %v1077, %v1392
        %v1394 = vpop.f32.mrb[0].mxu0
        %1395 = vmatprep.mubr.f32.mxu0 0.0
        %v1396 = vand.u32 %v351, 4294901760
        %v1397 = vsub.f32 %v351, %v1396
        %1398 = vmatmul.mubr.f32.gmra.mrb[0].mxu0 %v1397
        %v1399 = vpop.f32.mrb[0].mxu0
        %v1400 = vadd.f32 %v1083, %v1399
        %v1401 = vpop.f32.mrb[0].mxu0
        %1402 = vmatprep.mubr.f32.mxu0 0.0
        %v1403 = vand.u32 %v352, 4294901760
        %v1404 = vsub.f32 %v352, %v1403
        %1405 = vmatmul.mubr.f32.gmra.mrb[0].mxu0 %v1404
        %v1406 = vpop.f32.mrb[0].mxu0
        %v1407 = vadd.f32 %v1089, %v1406
        %v1408 = vpop.f32.mrb[0].mxu0
        %1409 = vmatprep.mubr.f32.mxu0 0.0
        %v1410 = vand.u32 %v353, 4294901760
        %v1411 = vsub.f32 %v353, %v1410
        %1412 = vmatmul.mubr.f32.gmra.mrb[0].mxu0 %v1411
        %v1413 = vpop.f32.mrb[0].mxu0
        %v1414 = vadd.f32 %v1095, %v1413
        %v1415 = vpop.f32.mrb[0].mxu0
        %1416 = vmatprep.mubr.f32.mxu0 0.0
        %v1417 = vand.u32 %v354, 4294901760
        %v1418 = vsub.f32 %v354, %v1417
        %1419 = vmatmul.mubr.f32.gmra.mrb[0].mxu0 %v1418
        %v1420 = vpop.f32.mrb[0].mxu0
        %v1421 = vadd.f32 %v1101, %v1420
        %v1422 = vpop.f32.mrb[0].mxu0
        %1423 = vmatprep.mubr.f32.mxu0 0.0
        %v1424 = vand.u32 %v355, 4294901760
        %v1425 = vsub.f32 %v355, %v1424
        %1426 = vmatmul.mubr.f32.gmra.mrb[0].mxu0 %v1425
        %v1427 = vpop.f32.mrb[0].mxu0
        %v1428 = vadd.f32 %v1107, %v1427
        %v1429 = vpop.f32.mrb[0].mxu0
        %1430 = vdwg.mxu0
        %1431 = vmatprep.subr.mxu0 0.0
        %v1432 = vand.u32 %v356, 4294901760
        %1433 = vmatpush1.msra.mxu0 %v1432
        %1434 = vmatprep.subr.mxu0 0.0
        %v1435 = vand.u32 %v357, 4294901760
        %1436 = vmatpush1.msra.mxu0 %v1435
        %1437 = vmatprep.subr.mxu0 0.0
        %v1438 = vand.u32 %v358, 4294901760
        %1439 = vmatpush1.msra.mxu0 %v1438
        %1440 = vmatprep.subr.mxu0 0.0
        %v1441 = vand.u32 %v359, 4294901760
        %1442 = vmatpush1.msra.mxu0 %v1441
        %1443 = vmatprep.subr.mxu0 0.0
        %v1444 = vand.u32 %v360, 4294901760
        %1445 = vmatpush1.msra.mxu0 %v1444
        %1446 = vmatprep.subr.mxu0 0.0
        %v1447 = vand.u32 %v361, 4294901760
        %1448 = vmatpush1.msra.mxu0 %v1447
        %1449 = vmatprep.subr.mxu0 0.0
        %v1450 = vand.u32 %v362, 4294901760
        %1451 = vmatpush1.msra.mxu0 %v1450
        %1452 = vmatprep.subr.mxu0 0.0
        %v1453 = vand.u32 %v363, 4294901760
        %1454 = vmatpush1.msra.mxu0 %v1453
        %1455 = vmatprep.subr.mxu0 0.0
        %v1456 = vand.u32 %v364, 4294901760
        %1457 = vmatpush1.msra.mxu0 %v1456
        %1458 = vmatprep.subr.mxu0 0.0
        %v1459 = vand.u32 %v365, 4294901760
        %1460 = vmatpush1.msra.mxu0 %v1459
        %1461 = vmatprep.subr.mxu0 0.0
        %v1462 = vand.u32 %v366, 4294901760
        %1463 = vmatpush1.msra.mxu0 %v1462
        %1464 = vmatprep.subr.mxu0 0.0
        %v1465 = vand.u32 %v367, 4294901760
        %1466 = vmatpush1.msra.mxu0 %v1465
        %1467 = vmatprep.subr.mxu0 0.0
        %v1468 = vand.u32 %v368, 4294901760
        %1469 = vmatpush1.msra.mxu0 %v1468
        %1470 = vmatprep.subr.mxu0 0.0
        %v1471 = vand.u32 %v369, 4294901760
        %1472 = vmatpush1.msra.mxu0 %v1471
        %1473 = vmatprep.subr.mxu0 0.0
        %v1474 = vand.u32 %v370, 4294901760
        %1475 = vmatpush1.msra.mxu0 %v1474
        %1476 = vmatprep.subr.mxu0 0.0
        %v1477 = vand.u32 %v371, 4294901760
        %1478 = vmatpush1.msra.mxu0 %v1477
        %1479 = vmatprep.subr.mxu0 0.0
        %1480 = vmatpush1.msra.mxu0 0.0
        %1481 = vmatprep.subr.mxu0 0.0
        %1482 = vmatpush1.msra.mxu0 0.0
        %1483 = vmatprep.subr.mxu0 0.0
        %1484 = vmatpush1.msra.mxu0 0.0
        %1485 = vmatprep.subr.mxu0 0.0
        %1486 = vmatpush1.msra.mxu0 0.0
        %1487 = vmatprep.subr.mxu0 0.0
        %1488 = vmatpush1.msra.mxu0 0.0
        %1489 = vmatprep.subr.mxu0 0.0
        %1490 = vmatpush1.msra.mxu0 0.0
        %1491 = vmatprep.subr.mxu0 0.0
        %1492 = vmatpush1.msra.mxu0 0.0
        %1493 = vmatprep.subr.mxu0 0.0
        %1494 = vmatpush1.msra.mxu0 0.0
        %1495 = vmatprep.subr.mxu0 0.0
        %1496 = vmatpush1.msra.mxu0 0.0
        %1497 = vmatprep.subr.mxu0 0.0
        %1498 = vmatpush1.msra.mxu0 0.0
        %1499 = vmatprep.subr.mxu0 0.0
        %1500 = vmatpush1.msra.mxu0 0.0
        %1501 = vmatprep.subr.mxu0 0.0
        %1502 = vmatpush1.msra.mxu0 0.0
        %1503 = vmatprep.subr.mxu0 0.0
        %1504 = vmatpush1.msra.mxu0 0.0
        %1505 = vmatprep.subr.mxu0 0.0
        %1506 = vmatpush1.msra.mxu0 0.0
        %1507 = vmatprep.subr.mxu0 0.0
        %1508 = vmatpush1.msra.mxu0 0.0
        %1509 = vmatprep.subr.mxu0 0.0
        %1510 = vmatpush1.msra.mxu0 0.0
        %1511 = vmatprep.mubr.f32.mxu0 0.0
        %v1512 = vand.u32 %v324, 4294901760
        %v1513 = vsub.f32 %v324, %v1512
        %v1514 = vand.u32 %v1513, 4294901760
        %1515 = vmatmul.mubr.f32.gmra.mrb[0].mxu0 %v1514
        %v1516 = vpop.f32.mrb[0].mxu0
        %v1517 = vadd.f32 %v1211, %v1516
        %v1518 = vpop.f32.mrb[0].mxu0
        %1519 = vmatprep.mubr.f32.mxu0 0.0
        %v1520 = vand.u32 %v325, 4294901760
        %v1521 = vsub.f32 %v325, %v1520
        %v1522 = vand.u32 %v1521, 4294901760
        %1523 = vmatmul.mubr.f32.gmra.mrb[0].mxu0 %v1522
        %v1524 = vpop.f32.mrb[0].mxu0
        %v1525 = vadd.f32 %v1218, %v1524
        %v1526 = vpop.f32.mrb[0].mxu0
        %1527 = vmatprep.mubr.f32.mxu0 0.0
        %v1528 = vand.u32 %v326, 4294901760
        %v1529 = vsub.f32 %v326, %v1528
        %v1530 = vand.u32 %v1529, 4294901760
        %1531 = vmatmul.mubr.f32.gmra.mrb[0].mxu0 %v1530
        %v1532 = vpop.f32.mrb[0].mxu0
        %v1533 = vadd.f32 %v1225, %v1532
        %v1534 = vpop.f32.mrb[0].mxu0
        %1535 = vmatprep.mubr.f32.mxu0 0.0
        %v1536 = vand.u32 %v327, 4294901760
        %v1537 = vsub.f32 %v327, %v1536
        %v1538 = vand.u32 %v1537, 4294901760
        %1539 = vmatmul.mubr.f32.gmra.mrb[0].mxu0 %v1538
        %v1540 = vpop.f32.mrb[0].mxu0
        %v1541 = vadd.f32 %v1232, %v1540
        %v1542 = vpop.f32.mrb[0].mxu0
        %1543 = vmatprep.mubr.f32.mxu0 0.0
        %v1544 = vand.u32 %v328, 4294901760
        %v1545 = vsub.f32 %v328, %v1544
        %v1546 = vand.u32 %v1545, 4294901760
        %1547 = vmatmul.mubr.f32.gmra.mrb[0].mxu0 %v1546
        %v1548 = vpop.f32.mrb[0].mxu0
        %v1549 = vadd.f32 %v1239, %v1548
        %v1550 = vpop.f32.mrb[0].mxu0
        %1551 = vmatprep.mubr.f32.mxu0 0.0
        %v1552 = vand.u32 %v329, 4294901760
        %v1553 = vsub.f32 %v329, %v1552
        %v1554 = vand.u32 %v1553, 4294901760
        %1555 = vmatmul.mubr.f32.gmra.mrb[0].mxu0 %v1554
        %v1556 = vpop.f32.mrb[0].mxu0
        %v1557 = vadd.f32 %v1246, %v1556
        %v1558 = vpop.f32.mrb[0].mxu0
        %1559 = vmatprep.mubr.f32.mxu0 0.0
        %v1560 = vand.u32 %v330, 4294901760
        %v1561 = vsub.f32 %v330, %v1560
        %v1562 = vand.u32 %v1561, 4294901760
        %1563 = vmatmul.mubr.f32.gmra.mrb[0].mxu0 %v1562
        %v1564 = vpop.f32.mrb[0].mxu0
        %v1565 = vadd.f32 %v1253, %v1564
        %v1566 = vpop.f32.mrb[0].mxu0
        %1567 = vmatprep.mubr.f32.mxu0 0.0
        %v1568 = vand.u32 %v331, 4294901760
        %v1569 = vsub.f32 %v331, %v1568
        %v1570 = vand.u32 %v1569, 4294901760
        %1571 = vmatmul.mubr.f32.gmra.mrb[0].mxu0 %v1570
        %v1572 = vpop.f32.mrb[0].mxu0
        %v1573 = vadd.f32 %v1260, %v1572
        %v1574 = vpop.f32.mrb[0].mxu0
        %1575 = vmatprep.mubr.f32.mxu0 0.0
        %v1576 = vand.u32 %v332, 4294901760
        %v1577 = vsub.f32 %v332, %v1576
        %v1578 = vand.u32 %v1577, 4294901760
        %1579 = vmatmul.mubr.f32.gmra.mrb[0].mxu0 %v1578
        %v1580 = vpop.f32.mrb[0].mxu0
        %v1581 = vadd.f32 %v1267, %v1580
        %v1582 = vpop.f32.mrb[0].mxu0
        %1583 = vmatprep.mubr.f32.mxu0 0.0
        %v1584 = vand.u32 %v333, 4294901760
        %v1585 = vsub.f32 %v333, %v1584
        %v1586 = vand.u32 %v1585, 4294901760
        %1587 = vmatmul.mubr.f32.gmra.mrb[0].mxu0 %v1586
        %v1588 = vpop.f32.mrb[0].mxu0
        %v1589 = vadd.f32 %v1274, %v1588
        %v1590 = vpop.f32.mrb[0].mxu0
        %1591 = vmatprep.mubr.f32.mxu0 0.0
        %v1592 = vand.u32 %v334, 4294901760
        %v1593 = vsub.f32 %v334, %v1592
        %v1594 = vand.u32 %v1593, 4294901760
        %1595 = vmatmul.mubr.f32.gmra.mrb[0].mxu0 %v1594
        %v1596 = vpop.f32.mrb[0].mxu0
        %v1597 = vadd.f32 %v1281, %v1596
        %v1598 = vpop.f32.mrb[0].mxu0
        %1599 = vmatprep.mubr.f32.mxu0 0.0
        %v1600 = vand.u32 %v335, 4294901760
        %v1601 = vsub.f32 %v335, %v1600
        %v1602 = vand.u32 %v1601, 4294901760
        %1603 = vmatmul.mubr.f32.gmra.mrb[0].mxu0 %v1602
        %v1604 = vpop.f32.mrb[0].mxu0
        %v1605 = vadd.f32 %v1288, %v1604
        %v1606 = vpop.f32.mrb[0].mxu0
        %1607 = vmatprep.mubr.f32.mxu0 0.0
        %v1608 = vand.u32 %v336, 4294901760
        %v1609 = vsub.f32 %v336, %v1608
        %v1610 = vand.u32 %v1609, 4294901760
        %1611 = vmatmul.mubr.f32.gmra.mrb[0].mxu0 %v1610
        %v1612 = vpop.f32.mrb[0].mxu0
        %v1613 = vadd.f32 %v1295, %v1612
        %v1614 = vpop.f32.mrb[0].mxu0
        %1615 = vmatprep.mubr.f32.mxu0 0.0
        %v1616 = vand.u32 %v337, 4294901760
        %v1617 = vsub.f32 %v337, %v1616
        %v1618 = vand.u32 %v1617, 4294901760
        %1619 = vmatmul.mubr.f32.gmra.mrb[0].mxu0 %v1618
        %v1620 = vpop.f32.mrb[0].mxu0
        %v1621 = vadd.f32 %v1302, %v1620
        %v1622 = vpop.f32.mrb[0].mxu0
        %1623 = vmatprep.mubr.f32.mxu0 0.0
        %v1624 = vand.u32 %v338, 4294901760
        %v1625 = vsub.f32 %v338, %v1624
        %v1626 = vand.u32 %v1625, 4294901760
        %1627 = vmatmul.mubr.f32.gmra.mrb[0].mxu0 %v1626
        %v1628 = vpop.f32.mrb[0].mxu0
        %v1629 = vadd.f32 %v1309, %v1628
        %v1630 = vpop.f32.mrb[0].mxu0
        %1631 = vmatprep.mubr.f32.mxu0 0.0
        %v1632 = vand.u32 %v339, 4294901760
        %v1633 = vsub.f32 %v339, %v1632
        %v1634 = vand.u32 %v1633, 4294901760
        %1635 = vmatmul.mubr.f32.gmra.mrb[0].mxu0 %v1634
        %v1636 = vpop.f32.mrb[0].mxu0
        %v1637 = vadd.f32 %v1316, %v1636
        %v1638 = vpop.f32.mrb[0].mxu0
        %1639 = vmatprep.mubr.f32.mxu0 0.0
        %v1640 = vand.u32 %v340, 4294901760
        %v1641 = vsub.f32 %v340, %v1640
        %v1642 = vand.u32 %v1641, 4294901760
        %1643 = vmatmul.mubr.f32.gmra.mrb[0].mxu0 %v1642
        %v1644 = vpop.f32.mrb[0].mxu0
        %v1645 = vadd.f32 %v1323, %v1644
        %v1646 = vpop.f32.mrb[0].mxu0
        %1647 = vmatprep.mubr.f32.mxu0 0.0
        %v1648 = vand.u32 %v341, 4294901760
        %v1649 = vsub.f32 %v341, %v1648
        %v1650 = vand.u32 %v1649, 4294901760
        %1651 = vmatmul.mubr.f32.gmra.mrb[0].mxu0 %v1650
        %v1652 = vpop.f32.mrb[0].mxu0
        %v1653 = vadd.f32 %v1330, %v1652
        %v1654 = vpop.f32.mrb[0].mxu0
        %1655 = vmatprep.mubr.f32.mxu0 0.0
        %v1656 = vand.u32 %v342, 4294901760
        %v1657 = vsub.f32 %v342, %v1656
        %v1658 = vand.u32 %v1657, 4294901760
        %1659 = vmatmul.mubr.f32.gmra.mrb[0].mxu0 %v1658
        %v1660 = vpop.f32.mrb[0].mxu0
        %v1661 = vadd.f32 %v1337, %v1660
        %v1662 = vpop.f32.mrb[0].mxu0
        %1663 = vmatprep.mubr.f32.mxu0 0.0
        %v1664 = vand.u32 %v343, 4294901760
        %v1665 = vsub.f32 %v343, %v1664
        %v1666 = vand.u32 %v1665, 4294901760
        %1667 = vmatmul.mubr.f32.gmra.mrb[0].mxu0 %v1666
        %v1668 = vpop.f32.mrb[0].mxu0
        %v1669 = vadd.f32 %v1344, %v1668
        %v1670 = vpop.f32.mrb[0].mxu0
        %1671 = vmatprep.mubr.f32.mxu0 0.0
        %v1672 = vand.u32 %v344, 4294901760
        %v1673 = vsub.f32 %v344, %v1672
        %v1674 = vand.u32 %v1673, 4294901760
        %1675 = vmatmul.mubr.f32.gmra.mrb[0].mxu0 %v1674
        %v1676 = vpop.f32.mrb[0].mxu0
        %v1677 = vadd.f32 %v1351, %v1676
        %v1678 = vpop.f32.mrb[0].mxu0
        %1679 = vmatprep.mubr.f32.mxu0 0.0
        %v1680 = vand.u32 %v345, 4294901760
        %v1681 = vsub.f32 %v345, %v1680
        %v1682 = vand.u32 %v1681, 4294901760
        %1683 = vmatmul.mubr.f32.gmra.mrb[0].mxu0 %v1682
        %v1684 = vpop.f32.mrb[0].mxu0
        %v1685 = vadd.f32 %v1358, %v1684
        %v1686 = vpop.f32.mrb[0].mxu0
        %1687 = vmatprep.mubr.f32.mxu0 0.0
        %v1688 = vand.u32 %v346, 4294901760
        %v1689 = vsub.f32 %v346, %v1688
        %v1690 = vand.u32 %v1689, 4294901760
        %1691 = vmatmul.mubr.f32.gmra.mrb[0].mxu0 %v1690
        %v1692 = vpop.f32.mrb[0].mxu0
        %v1693 = vadd.f32 %v1365, %v1692
        %v1694 = vpop.f32.mrb[0].mxu0
        %1695 = vmatprep.mubr.f32.mxu0 0.0
        %v1696 = vand.u32 %v347, 4294901760
        %v1697 = vsub.f32 %v347, %v1696
        %v1698 = vand.u32 %v1697, 4294901760
        %1699 = vmatmul.mubr.f32.gmra.mrb[0].mxu0 %v1698
        %v1700 = vpop.f32.mrb[0].mxu0
        %v1701 = vadd.f32 %v1372, %v1700
        %v1702 = vpop.f32.mrb[0].mxu0
        %1703 = vmatprep.mubr.f32.mxu0 0.0
        %v1704 = vand.u32 %v348, 4294901760
        %v1705 = vsub.f32 %v348, %v1704
        %v1706 = vand.u32 %v1705, 4294901760
        %1707 = vmatmul.mubr.f32.gmra.mrb[0].mxu0 %v1706
        %v1708 = vpop.f32.mrb[0].mxu0
        %v1709 = vadd.f32 %v1379, %v1708
        %v1710 = vpop.f32.mrb[0].mxu0
        %1711 = vmatprep.mubr.f32.mxu0 0.0
        %v1712 = vand.u32 %v349, 4294901760
        %v1713 = vsub.f32 %v349, %v1712
        %v1714 = vand.u32 %v1713, 4294901760
        %1715 = vmatmul.mubr.f32.gmra.mrb[0].mxu0 %v1714
        %v1716 = vpop.f32.mrb[0].mxu0
        %v1717 = vadd.f32 %v1386, %v1716
        %v1718 = vpop.f32.mrb[0].mxu0
        %1719 = vmatprep.mubr.f32.mxu0 0.0
        %v1720 = vand.u32 %v350, 4294901760
        %v1721 = vsub.f32 %v350, %v1720
        %v1722 = vand.u32 %v1721, 4294901760
        %1723 = vmatmul.mubr.f32.gmra.mrb[0].mxu0 %v1722
        %v1724 = vpop.f32.mrb[0].mxu0
        %v1725 = vadd.f32 %v1393, %v1724
        %v1726 = vpop.f32.mrb[0].mxu0
        %1727 = vmatprep.mubr.f32.mxu0 0.0
        %v1728 = vand.u32 %v351, 4294901760
        %v1729 = vsub.f32 %v351, %v1728
        %v1730 = vand.u32 %v1729, 4294901760
        %1731 = vmatmul.mubr.f32.gmra.mrb[0].mxu0 %v1730
        %v1732 = vpop.f32.mrb[0].mxu0
        %v1733 = vadd.f32 %v1400, %v1732
        %v1734 = vpop.f32.mrb[0].mxu0
        %1735 = vmatprep.mubr.f32.mxu0 0.0
        %v1736 = vand.u32 %v352, 4294901760
        %v1737 = vsub.f32 %v352, %v1736
        %v1738 = vand.u32 %v1737, 4294901760
        %1739 = vmatmul.mubr.f32.gmra.mrb[0].mxu0 %v1738
        %v1740 = vpop.f32.mrb[0].mxu0
        %v1741 = vadd.f32 %v1407, %v1740
        %v1742 = vpop.f32.mrb[0].mxu0
        %1743 = vmatprep.mubr.f32.mxu0 0.0
        %v1744 = vand.u32 %v353, 4294901760
        %v1745 = vsub.f32 %v353, %v1744
        %v1746 = vand.u32 %v1745, 4294901760
        %1747 = vmatmul.mubr.f32.gmra.mrb[0].mxu0 %v1746
        %v1748 = vpop.f32.mrb[0].mxu0
        %v1749 = vadd.f32 %v1414, %v1748
        %v1750 = vpop.f32.mrb[0].mxu0
        %1751 = vmatprep.mubr.f32.mxu0 0.0
        %v1752 = vand.u32 %v354, 4294901760
        %v1753 = vsub.f32 %v354, %v1752
        %v1754 = vand.u32 %v1753, 4294901760
        %1755 = vmatmul.mubr.f32.gmra.mrb[0].mxu0 %v1754
        %v1756 = vpop.f32.mrb[0].mxu0
        %v1757 = vadd.f32 %v1421, %v1756
        %v1758 = vpop.f32.mrb[0].mxu0
        %1759 = vmatprep.mubr.f32.mxu0 0.0
        %v1760 = vand.u32 %v355, 4294901760
        %v1761 = vsub.f32 %v355, %v1760
        %v1762 = vand.u32 %v1761, 4294901760
        %1763 = vmatmul.mubr.f32.gmra.mrb[0].mxu0 %v1762
        %v1764 = vpop.f32.mrb[0].mxu0
        %v1765 = vadd.f32 %v1428, %v1764
        %v1766 = vpop.f32.mrb[0].mxu0
        %1767 = vdwg.mxu0
        %1768 = vmatprep.subr.mxu0 0.0
        %v1769 = vand.u32 %v356, 4294901760
        %v1770 = vsub.f32 %v356, %v1769
        %v1771 = vand.u32 %v1770, 4294901760
        %1772 = vmatpush1.msra.mxu0 %v1771
        %1773 = vmatprep.subr.mxu0 0.0
        %v1774 = vand.u32 %v357, 4294901760
        %v1775 = vsub.f32 %v357, %v1774
        %v1776 = vand.u32 %v1775, 4294901760
        %1777 = vmatpush1.msra.mxu0 %v1776
        %1778 = vmatprep.subr.mxu0 0.0
        %v1779 = vand.u32 %v358, 4294901760
        %v1780 = vsub.f32 %v358, %v1779
        %v1781 = vand.u32 %v1780, 4294901760
        %1782 = vmatpush1.msra.mxu0 %v1781
        %1783 = vmatprep.subr.mxu0 0.0
        %v1784 = vand.u32 %v359, 4294901760
        %v1785 = vsub.f32 %v359, %v1784
        %v1786 = vand.u32 %v1785, 4294901760
        %1787 = vmatpush1.msra.mxu0 %v1786
        %1788 = vmatprep.subr.mxu0 0.0
        %v1789 = vand.u32 %v360, 4294901760
        %v1790 = vsub.f32 %v360, %v1789
        %v1791 = vand.u32 %v1790, 4294901760
        %1792 = vmatpush1.msra.mxu0 %v1791
        %1793 = vmatprep.subr.mxu0 0.0
        %v1794 = vand.u32 %v361, 4294901760
        %v1795 = vsub.f32 %v361, %v1794
        %v1796 = vand.u32 %v1795, 4294901760
        %1797 = vmatpush1.msra.mxu0 %v1796
        %1798 = vmatprep.subr.mxu0 0.0
        %v1799 = vand.u32 %v362, 4294901760
        %v1800 = vsub.f32 %v362, %v1799
        %v1801 = vand.u32 %v1800, 4294901760
        %1802 = vmatpush1.msra.mxu0 %v1801
        %1803 = vmatprep.subr.mxu0 0.0
        %v1804 = vand.u32 %v363, 4294901760
        %v1805 = vsub.f32 %v363, %v1804
        %v1806 = vand.u32 %v1805, 4294901760
        %1807 = vmatpush1.msra.mxu0 %v1806
        %1808 = vmatprep.subr.mxu0 0.0
        %v1809 = vand.u32 %v364, 4294901760
        %v1810 = vsub.f32 %v364, %v1809
        %v1811 = vand.u32 %v1810, 4294901760
        %1812 = vmatpush1.msra.mxu0 %v1811
        %1813 = vmatprep.subr.mxu0 0.0
        %v1814 = vand.u32 %v365, 4294901760
        %v1815 = vsub.f32 %v365, %v1814
        %v1816 = vand.u32 %v1815, 4294901760
        %1817 = vmatpush1.msra.mxu0 %v1816
        %1818 = vmatprep.subr.mxu0 0.0
        %v1819 = vand.u32 %v366, 4294901760
        %v1820 = vsub.f32 %v366, %v1819
        %v1821 = vand.u32 %v1820, 4294901760
        %1822 = vmatpush1.msra.mxu0 %v1821
        %1823 = vmatprep.subr.mxu0 0.0
        %v1824 = vand.u32 %v367, 4294901760
        %v1825 = vsub.f32 %v367, %v1824
        %v1826 = vand.u32 %v1825, 4294901760
        %1827 = vmatpush1.msra.mxu0 %v1826
        %1828 = vmatprep.subr.mxu0 0.0
        %v1829 = vand.u32 %v368, 4294901760
        %v1830 = vsub.f32 %v368, %v1829
        %v1831 = vand.u32 %v1830, 4294901760
        %1832 = vmatpush1.msra.mxu0 %v1831
        %1833 = vmatprep.subr.mxu0 0.0
        %v1834 = vand.u32 %v369, 4294901760
        %v1835 = vsub.f32 %v369, %v1834
        %v1836 = vand.u32 %v1835, 4294901760
        %1837 = vmatpush1.msra.mxu0 %v1836
        %1838 = vmatprep.subr.mxu0 0.0
        %v1839 = vand.u32 %v370, 4294901760
        %v1840 = vsub.f32 %v370, %v1839
        %v1841 = vand.u32 %v1840, 4294901760
        %1842 = vmatpush1.msra.mxu0 %v1841
        %1843 = vmatprep.subr.mxu0 0.0
        %v1844 = vand.u32 %v371, 4294901760
        %v1845 = vsub.f32 %v371, %v1844
        %v1846 = vand.u32 %v1845, 4294901760
        %1847 = vmatpush1.msra.mxu0 %v1846
        %1848 = vmatprep.subr.mxu0 0.0
        %1849 = vmatpush1.msra.mxu0 0.0
        %1850 = vmatprep.subr.mxu0 0.0
        %1851 = vmatpush1.msra.mxu0 0.0
        %1852 = vmatprep.subr.mxu0 0.0
        %1853 = vmatpush1.msra.mxu0 0.0
        %1854 = vmatprep.subr.mxu0 0.0
        %1855 = vmatpush1.msra.mxu0 0.0
        %1856 = vmatprep.subr.mxu0 0.0
        %1857 = vmatpush1.msra.mxu0 0.0
        %1858 = vmatprep.subr.mxu0 0.0
        %1859 = vmatpush1.msra.mxu0 0.0
        %1860 = vmatprep.subr.mxu0 0.0
        %1861 = vmatpush1.msra.mxu0 0.0
        %1862 = vmatprep.subr.mxu0 0.0
        %1863 = vmatpush1.msra.mxu0 0.0
        %1864 = vmatprep.subr.mxu0 0.0
        %1865 = vmatpush1.msra.mxu0 0.0
        %1866 = vmatprep.subr.mxu0 0.0
        %1867 = vmatpush1.msra.mxu0 0.0
        %1868 = vmatprep.subr.mxu0 0.0
        %1869 = vmatpush1.msra.mxu0 0.0
        %1870 = vmatprep.subr.mxu0 0.0
        %1871 = vmatpush1.msra.mxu0 0.0
        %1872 = vmatprep.subr.mxu0 0.0
        %1873 = vmatpush1.msra.mxu0 0.0
        %1874 = vmatprep.subr.mxu0 0.0
        %1875 = vmatpush1.msra.mxu0 0.0
        %1876 = vmatprep.subr.mxu0 0.0
        %1877 = vmatpush1.msra.mxu0 0.0
        %1878 = vmatprep.subr.mxu0 0.0
        %1879 = vmatpush1.msra.mxu0 0.0
        %1880 = vmatprep.mubr.f32.mxu0 0.0
        %v1881 = vand.u32 %v324, 4294901760
        %1882 = vmatmul.mubr.f32.gmra.mrb[0].mxu0 %v1881
        %v1883 = vpop.f32.mrb[0].mxu0
        %v1884 = vadd.f32 %v1517, %v1883
        %v1885 = vpop.f32.mrb[0].mxu0
        %1886 = vmatprep.mubr.f32.mxu0 0.0
        %v1887 = vand.u32 %v325, 4294901760
        %1888 = vmatmul.mubr.f32.gmra.mrb[0].mxu0 %v1887
        %v1889 = vpop.f32.mrb[0].mxu0
        %v1890 = vadd.f32 %v1525, %v1889
        %v1891 = vpop.f32.mrb[0].mxu0
        %1892 = vmatprep.mubr.f32.mxu0 0.0
        %v1893 = vand.u32 %v326, 4294901760
        %1894 = vmatmul.mubr.f32.gmra.mrb[0].mxu0 %v1893
        %v1895 = vpop.f32.mrb[0].mxu0
        %v1896 = vadd.f32 %v1533, %v1895
        %v1897 = vpop.f32.mrb[0].mxu0
        %1898 = vmatprep.mubr.f32.mxu0 0.0
        %v1899 = vand.u32 %v327, 4294901760
        %1900 = vmatmul.mubr.f32.gmra.mrb[0].mxu0 %v1899
        %v1901 = vpop.f32.mrb[0].mxu0
        %v1902 = vadd.f32 %v1541, %v1901
        %v1903 = vpop.f32.mrb[0].mxu0
        %1904 = vmatprep.mubr.f32.mxu0 0.0
        %v1905 = vand.u32 %v328, 4294901760
        %1906 = vmatmul.mubr.f32.gmra.mrb[0].mxu0 %v1905
        %v1907 = vpop.f32.mrb[0].mxu0
        %v1908 = vadd.f32 %v1549, %v1907
        %v1909 = vpop.f32.mrb[0].mxu0
        %1910 = vmatprep.mubr.f32.mxu0 0.0
        %v1911 = vand.u32 %v329, 4294901760
        %1912 = vmatmul.mubr.f32.gmra.mrb[0].mxu0 %v1911
        %v1913 = vpop.f32.mrb[0].mxu0
        %v1914 = vadd.f32 %v1557, %v1913
        %v1915 = vpop.f32.mrb[0].mxu0
        %1916 = vmatprep.mubr.f32.mxu0 0.0
        %v1917 = vand.u32 %v330, 4294901760
        %1918 = vmatmul.mubr.f32.gmra.mrb[0].mxu0 %v1917
        %v1919 = vpop.f32.mrb[0].mxu0
        %v1920 = vadd.f32 %v1565, %v1919
        %v1921 = vpop.f32.mrb[0].mxu0
        %1922 = vmatprep.mubr.f32.mxu0 0.0
        %v1923 = vand.u32 %v331, 4294901760
        %1924 = vmatmul.mubr.f32.gmra.mrb[0].mxu0 %v1923
        %v1925 = vpop.f32.mrb[0].mxu0
        %v1926 = vadd.f32 %v1573, %v1925
        %v1927 = vpop.f32.mrb[0].mxu0
        %1928 = vmatprep.mubr.f32.mxu0 0.0
        %v1929 = vand.u32 %v332, 4294901760
        %1930 = vmatmul.mubr.f32.gmra.mrb[0].mxu0 %v1929
        %v1931 = vpop.f32.mrb[0].mxu0
        %v1932 = vadd.f32 %v1581, %v1931
        %v1933 = vpop.f32.mrb[0].mxu0
        %1934 = vmatprep.mubr.f32.mxu0 0.0
        %v1935 = vand.u32 %v333, 4294901760
        %1936 = vmatmul.mubr.f32.gmra.mrb[0].mxu0 %v1935
        %v1937 = vpop.f32.mrb[0].mxu0
        %v1938 = vadd.f32 %v1589, %v1937
        %v1939 = vpop.f32.mrb[0].mxu0
        %1940 = vmatprep.mubr.f32.mxu0 0.0
        %v1941 = vand.u32 %v334, 4294901760
        %1942 = vmatmul.mubr.f32.gmra.mrb[0].mxu0 %v1941
        %v1943 = vpop.f32.mrb[0].mxu0
        %v1944 = vadd.f32 %v1597, %v1943
        %v1945 = vpop.f32.mrb[0].mxu0
        %1946 = vmatprep.mubr.f32.mxu0 0.0
        %v1947 = vand.u32 %v335, 4294901760
        %1948 = vmatmul.mubr.f32.gmra.mrb[0].mxu0 %v1947
        %v1949 = vpop.f32.mrb[0].mxu0
        %v1950 = vadd.f32 %v1605, %v1949
        %v1951 = vpop.f32.mrb[0].mxu0
        %1952 = vmatprep.mubr.f32.mxu0 0.0
        %v1953 = vand.u32 %v336, 4294901760
        %1954 = vmatmul.mubr.f32.gmra.mrb[0].mxu0 %v1953
        %v1955 = vpop.f32.mrb[0].mxu0
        %v1956 = vadd.f32 %v1613, %v1955
        %v1957 = vpop.f32.mrb[0].mxu0
        %1958 = vmatprep.mubr.f32.mxu0 0.0
        %v1959 = vand.u32 %v337, 4294901760
        %1960 = vmatmul.mubr.f32.gmra.mrb[0].mxu0 %v1959
        %v1961 = vpop.f32.mrb[0].mxu0
        %v1962 = vadd.f32 %v1621, %v1961
        %v1963 = vpop.f32.mrb[0].mxu0
        %1964 = vmatprep.mubr.f32.mxu0 0.0
        %v1965 = vand.u32 %v338, 4294901760
        %1966 = vmatmul.mubr.f32.gmra.mrb[0].mxu0 %v1965
        %v1967 = vpop.f32.mrb[0].mxu0
        %v1968 = vadd.f32 %v1629, %v1967
        %v1969 = vpop.f32.mrb[0].mxu0
        %1970 = vmatprep.mubr.f32.mxu0 0.0
        %v1971 = vand.u32 %v339, 4294901760
        %1972 = vmatmul.mubr.f32.gmra.mrb[0].mxu0 %v1971
        %v1973 = vpop.f32.mrb[0].mxu0
        %v1974 = vadd.f32 %v1637, %v1973
        %v1975 = vpop.f32.mrb[0].mxu0
        %1976 = vmatprep.mubr.f32.mxu0 0.0
        %v1977 = vand.u32 %v340, 4294901760
        %1978 = vmatmul.mubr.f32.gmra.mrb[0].mxu0 %v1977
        %v1979 = vpop.f32.mrb[0].mxu0
        %v1980 = vadd.f32 %v1645, %v1979
        %v1981 = vpop.f32.mrb[0].mxu0
        %1982 = vmatprep.mubr.f32.mxu0 0.0
        %v1983 = vand.u32 %v341, 4294901760
        %1984 = vmatmul.mubr.f32.gmra.mrb[0].mxu0 %v1983
        %v1985 = vpop.f32.mrb[0].mxu0
        %v1986 = vadd.f32 %v1653, %v1985
        %v1987 = vpop.f32.mrb[0].mxu0
        %1988 = vmatprep.mubr.f32.mxu0 0.0
        %v1989 = vand.u32 %v342, 4294901760
        %1990 = vmatmul.mubr.f32.gmra.mrb[0].mxu0 %v1989
        %v1991 = vpop.f32.mrb[0].mxu0
        %v1992 = vadd.f32 %v1661, %v1991
        %v1993 = vpop.f32.mrb[0].mxu0
        %1994 = vmatprep.mubr.f32.mxu0 0.0
        %v1995 = vand.u32 %v343, 4294901760
        %1996 = vmatmul.mubr.f32.gmra.mrb[0].mxu0 %v1995
        %v1997 = vpop.f32.mrb[0].mxu0
        %v1998 = vadd.f32 %v1669, %v1997
        %v1999 = vpop.f32.mrb[0].mxu0
        %2000 = vmatprep.mubr.f32.mxu0 0.0
        %v2001 = vand.u32 %v344, 4294901760
        %2002 = vmatmul.mubr.f32.gmra.mrb[0].mxu0 %v2001
        %v2003 = vpop.f32.mrb[0].mxu0
        %v2004 = vadd.f32 %v1677, %v2003
        %v2005 = vpop.f32.mrb[0].mxu0
        %2006 = vmatprep.mubr.f32.mxu0 0.0
        %v2007 = vand.u32 %v345, 4294901760
        %2008 = vmatmul.mubr.f32.gmra.mrb[0].mxu0 %v2007
        %v2009 = vpop.f32.mrb[0].mxu0
        %v2010 = vadd.f32 %v1685, %v2009
        %v2011 = vpop.f32.mrb[0].mxu0
        %2012 = vmatprep.mubr.f32.mxu0 0.0
        %v2013 = vand.u32 %v346, 4294901760
        %2014 = vmatmul.mubr.f32.gmra.mrb[0].mxu0 %v2013
        %v2015 = vpop.f32.mrb[0].mxu0
        %v2016 = vadd.f32 %v1693, %v2015
        %v2017 = vpop.f32.mrb[0].mxu0
        %2018 = vmatprep.mubr.f32.mxu0 0.0
        %v2019 = vand.u32 %v347, 4294901760
        %2020 = vmatmul.mubr.f32.gmra.mrb[0].mxu0 %v2019
        %v2021 = vpop.f32.mrb[0].mxu0
        %v2022 = vadd.f32 %v1701, %v2021
        %v2023 = vpop.f32.mrb[0].mxu0
        %2024 = vmatprep.mubr.f32.mxu0 0.0
        %v2025 = vand.u32 %v348, 4294901760
        %2026 = vmatmul.mubr.f32.gmra.mrb[0].mxu0 %v2025
        %v2027 = vpop.f32.mrb[0].mxu0
        %v2028 = vadd.f32 %v1709, %v2027
        %v2029 = vpop.f32.mrb[0].mxu0
        %2030 = vmatprep.mubr.f32.mxu0 0.0
        %v2031 = vand.u32 %v349, 4294901760
        %2032 = vmatmul.mubr.f32.gmra.mrb[0].mxu0 %v2031
        %v2033 = vpop.f32.mrb[0].mxu0
        %v2034 = vadd.f32 %v1717, %v2033
        %v2035 = vpop.f32.mrb[0].mxu0
        %2036 = vmatprep.mubr.f32.mxu0 0.0
        %v2037 = vand.u32 %v350, 4294901760
        %2038 = vmatmul.mubr.f32.gmra.mrb[0].mxu0 %v2037
        %v2039 = vpop.f32.mrb[0].mxu0
        %v2040 = vadd.f32 %v1725, %v2039
        %v2041 = vpop.f32.mrb[0].mxu0
        %2042 = vmatprep.mubr.f32.mxu0 0.0
        %v2043 = vand.u32 %v351, 4294901760
        %2044 = vmatmul.mubr.f32.gmra.mrb[0].mxu0 %v2043
        %v2045 = vpop.f32.mrb[0].mxu0
        %v2046 = vadd.f32 %v1733, %v2045
        %v2047 = vpop.f32.mrb[0].mxu0
        %2048 = vmatprep.mubr.f32.mxu0 0.0
        %v2049 = vand.u32 %v352, 4294901760
        %2050 = vmatmul.mubr.f32.gmra.mrb[0].mxu0 %v2049
        %v2051 = vpop.f32.mrb[0].mxu0
        %v2052 = vadd.f32 %v1741, %v2051
        %v2053 = vpop.f32.mrb[0].mxu0
        %2054 = vmatprep.mubr.f32.mxu0 0.0
        %v2055 = vand.u32 %v353, 4294901760
        %2056 = vmatmul.mubr.f32.gmra.mrb[0].mxu0 %v2055
        %v2057 = vpop.f32.mrb[0].mxu0
        %v2058 = vadd.f32 %v1749, %v2057
        %v2059 = vpop.f32.mrb[0].mxu0
        %2060 = vmatprep.mubr.f32.mxu0 0.0
        %v2061 = vand.u32 %v354, 4294901760
        %2062 = vmatmul.mubr.f32.gmra.mrb[0].mxu0 %v2061
        %v2063 = vpop.f32.mrb[0].mxu0
        %v2064 = vadd.f32 %v1757, %v2063
        %v2065 = vpop.f32.mrb[0].mxu0
        %2066 = vmatprep.mubr.f32.mxu0 0.0
        %v2067 = vand.u32 %v355, 4294901760
        %2068 = vmatmul.mubr.f32.gmra.mrb[0].mxu0 %v2067
        %v2069 = vpop.f32.mrb[0].mxu0
        %v2070 = vadd.f32 %v1765, %v2069
        %v2071 = vpop.f32.mrb[0].mxu0
        %2072 = vdwg.mxu0
        %2073 = vmatprep.subr.mxu0 0.0
        %v2074 = vand.u32 %v356, 4294901760
        %2075 = vmatpush1.msra.mxu0 %v2074
        %2076 = vmatprep.subr.mxu0 0.0
        %v2077 = vand.u32 %v357, 4294901760
        %2078 = vmatpush1.msra.mxu0 %v2077
        %2079 = vmatprep.subr.mxu0 0.0
        %v2080 = vand.u32 %v358, 4294901760
        %2081 = vmatpush1.msra.mxu0 %v2080
        %2082 = vmatprep.subr.mxu0 0.0
        %v2083 = vand.u32 %v359, 4294901760
        %2084 = vmatpush1.msra.mxu0 %v2083
        %2085 = vmatprep.subr.mxu0 0.0
        %v2086 = vand.u32 %v360, 4294901760
        %2087 = vmatpush1.msra.mxu0 %v2086
        %2088 = vmatprep.subr.mxu0 0.0
        %v2089 = vand.u32 %v361, 4294901760
        %2090 = vmatpush1.msra.mxu0 %v2089
        %2091 = vmatprep.subr.mxu0 0.0
        %v2092 = vand.u32 %v362, 4294901760
        %2093 = vmatpush1.msra.mxu0 %v2092
        %2094 = vmatprep.subr.mxu0 0.0
        %v2095 = vand.u32 %v363, 4294901760
        %2096 = vmatpush1.msra.mxu0 %v2095
        %2097 = vmatprep.subr.mxu0 0.0
        %v2098 = vand.u32 %v364, 4294901760
        %2099 = vmatpush1.msra.mxu0 %v2098
        %2100 = vmatprep.subr.mxu0 0.0
        %v2101 = vand.u32 %v365, 4294901760
        %2102 = vmatpush1.msra.mxu0 %v2101
        %2103 = vmatprep.subr.mxu0 0.0
        %v2104 = vand.u32 %v366, 4294901760
        %2105 = vmatpush1.msra.mxu0 %v2104
        %2106 = vmatprep.subr.mxu0 0.0
        %v2107 = vand.u32 %v367, 4294901760
        %2108 = vmatpush1.msra.mxu0 %v2107
        %2109 = vmatprep.subr.mxu0 0.0
        %v2110 = vand.u32 %v368, 4294901760
        %2111 = vmatpush1.msra.mxu0 %v2110
        %2112 = vmatprep.subr.mxu0 0.0
        %v2113 = vand.u32 %v369, 4294901760
        %2114 = vmatpush1.msra.mxu0 %v2113
        %2115 = vmatprep.subr.mxu0 0.0
        %v2116 = vand.u32 %v370, 4294901760
        %2117 = vmatpush1.msra.mxu0 %v2116
        %2118 = vmatprep.subr.mxu0 0.0
        %v2119 = vand.u32 %v371, 4294901760
        %2120 = vmatpush1.msra.mxu0 %v2119
        %2121 = vmatprep.subr.mxu0 0.0
        %2122 = vmatpush1.msra.mxu0 0.0
        %2123 = vmatprep.subr.mxu0 0.0
        %2124 = vmatpush1.msra.mxu0 0.0
        %2125 = vmatprep.subr.mxu0 0.0
        %2126 = vmatpush1.msra.mxu0 0.0
        %2127 = vmatprep.subr.mxu0 0.0
        %2128 = vmatpush1.msra.mxu0 0.0
        %2129 = vmatprep.subr.mxu0 0.0
        %2130 = vmatpush1.msra.mxu0 0.0
        %2131 = vmatprep.subr.mxu0 0.0
        %2132 = vmatpush1.msra.mxu0 0.0
        %2133 = vmatprep.subr.mxu0 0.0
        %2134 = vmatpush1.msra.mxu0 0.0
        %2135 = vmatprep.subr.mxu0 0.0
        %2136 = vmatpush1.msra.mxu0 0.0
        %2137 = vmatprep.subr.mxu0 0.0
        %2138 = vmatpush1.msra.mxu0 0.0
        %2139 = vmatprep.subr.mxu0 0.0
        %2140 = vmatpush1.msra.mxu0 0.0
        %2141 = vmatprep.subr.mxu0 0.0
        %2142 = vmatpush1.msra.mxu0 0.0
        %2143 = vmatprep.subr.mxu0 0.0
        %2144 = vmatpush1.msra.mxu0 0.0
        %2145 = vmatprep.subr.mxu0 0.0
        %2146 = vmatpush1.msra.mxu0 0.0
        %2147 = vmatprep.subr.mxu0 0.0
        %2148 = vmatpush1.msra.mxu0 0.0
        %2149 = vmatprep.subr.mxu0 0.0
        %2150 = vmatpush1.msra.mxu0 0.0
        %2151 = vmatprep.subr.mxu0 0.0
        %2152 = vmatpush1.msra.mxu0 0.0
        %2153 = vmatprep.mubr.f32.mxu0 0.0
        %v2154 = vand.u32 %v324, 4294901760
        %2155 = vmatmul.mubr.f32.gmra.mrb[0].mxu0 %v2154
        %v2156 = vpop.f32.mrb[0].mxu0
        %v2157 = vadd.f32 %v1884, %v2156
        %v2158 = vpop.f32.mrb[0].mxu0
        %2159 = vmatprep.mubr.f32.mxu0 0.0
        %v2160 = vand.u32 %v325, 4294901760
        %2161 = vmatmul.mubr.f32.gmra.mrb[0].mxu0 %v2160
        %v2162 = vpop.f32.mrb[0].mxu0
        %v2163 = vadd.f32 %v1890, %v2162
        %v2164 = vpop.f32.mrb[0].mxu0
        %2165 = vmatprep.mubr.f32.mxu0 0.0
        %v2166 = vand.u32 %v326, 4294901760
        %2167 = vmatmul.mubr.f32.gmra.mrb[0].mxu0 %v2166
        %v2168 = vpop.f32.mrb[0].mxu0
        %v2169 = vadd.f32 %v1896, %v2168
        %v2170 = vpop.f32.mrb[0].mxu0
        %2171 = vmatprep.mubr.f32.mxu0 0.0
        %v2172 = vand.u32 %v327, 4294901760
        %2173 = vmatmul.mubr.f32.gmra.mrb[0].mxu0 %v2172
        %v2174 = vpop.f32.mrb[0].mxu0
        %v2175 = vadd.f32 %v1902, %v2174
        %v2176 = vpop.f32.mrb[0].mxu0
        %2177 = vmatprep.mubr.f32.mxu0 0.0
        %v2178 = vand.u32 %v328, 4294901760
        %2179 = vmatmul.mubr.f32.gmra.mrb[0].mxu0 %v2178
        %v2180 = vpop.f32.mrb[0].mxu0
        %v2181 = vadd.f32 %v1908, %v2180
        %v2182 = vpop.f32.mrb[0].mxu0
        %2183 = vmatprep.mubr.f32.mxu0 0.0
        %v2184 = vand.u32 %v329, 4294901760
        %2185 = vmatmul.mubr.f32.gmra.mrb[0].mxu0 %v2184
        %v2186 = vpop.f32.mrb[0].mxu0
        %v2187 = vadd.f32 %v1914, %v2186
        %v2188 = vpop.f32.mrb[0].mxu0
        %2189 = vmatprep.mubr.f32.mxu0 0.0
        %v2190 = vand.u32 %v330, 4294901760
        %2191 = vmatmul.mubr.f32.gmra.mrb[0].mxu0 %v2190
        %v2192 = vpop.f32.mrb[0].mxu0
        %v2193 = vadd.f32 %v1920, %v2192
        %v2194 = vpop.f32.mrb[0].mxu0
        %2195 = vmatprep.mubr.f32.mxu0 0.0
        %v2196 = vand.u32 %v331, 4294901760
        %2197 = vmatmul.mubr.f32.gmra.mrb[0].mxu0 %v2196
        %v2198 = vpop.f32.mrb[0].mxu0
        %v2199 = vadd.f32 %v1926, %v2198
        %v2200 = vpop.f32.mrb[0].mxu0
        %2201 = vmatprep.mubr.f32.mxu0 0.0
        %v2202 = vand.u32 %v332, 4294901760
        %2203 = vmatmul.mubr.f32.gmra.mrb[0].mxu0 %v2202
        %v2204 = vpop.f32.mrb[0].mxu0
        %v2205 = vadd.f32 %v1932, %v2204
        %v2206 = vpop.f32.mrb[0].mxu0
        %2207 = vmatprep.mubr.f32.mxu0 0.0
        %v2208 = vand.u32 %v333, 4294901760
        %2209 = vmatmul.mubr.f32.gmra.mrb[0].mxu0 %v2208
        %v2210 = vpop.f32.mrb[0].mxu0
        %v2211 = vadd.f32 %v1938, %v2210
        %v2212 = vpop.f32.mrb[0].mxu0
        %2213 = vmatprep.mubr.f32.mxu0 0.0
        %v2214 = vand.u32 %v334, 4294901760
        %2215 = vmatmul.mubr.f32.gmra.mrb[0].mxu0 %v2214
        %v2216 = vpop.f32.mrb[0].mxu0
        %v2217 = vadd.f32 %v1944, %v2216
        %v2218 = vpop.f32.mrb[0].mxu0
        %2219 = vmatprep.mubr.f32.mxu0 0.0
        %v2220 = vand.u32 %v335, 4294901760
        %2221 = vmatmul.mubr.f32.gmra.mrb[0].mxu0 %v2220
        %v2222 = vpop.f32.mrb[0].mxu0
        %v2223 = vadd.f32 %v1950, %v2222
        %v2224 = vpop.f32.mrb[0].mxu0
        %2225 = vmatprep.mubr.f32.mxu0 0.0
        %v2226 = vand.u32 %v336, 4294901760
        %2227 = vmatmul.mubr.f32.gmra.mrb[0].mxu0 %v2226
        %v2228 = vpop.f32.mrb[0].mxu0
        %v2229 = vadd.f32 %v1956, %v2228
        %v2230 = vpop.f32.mrb[0].mxu0
        %2231 = vmatprep.mubr.f32.mxu0 0.0
        %v2232 = vand.u32 %v337, 4294901760
        %2233 = vmatmul.mubr.f32.gmra.mrb[0].mxu0 %v2232
        %v2234 = vpop.f32.mrb[0].mxu0
        %v2235 = vadd.f32 %v1962, %v2234
        %v2236 = vpop.f32.mrb[0].mxu0
        %2237 = vmatprep.mubr.f32.mxu0 0.0
        %v2238 = vand.u32 %v338, 4294901760
        %2239 = vmatmul.mubr.f32.gmra.mrb[0].mxu0 %v2238
        %v2240 = vpop.f32.mrb[0].mxu0
        %v2241 = vadd.f32 %v1968, %v2240
        %v2242 = vpop.f32.mrb[0].mxu0
        %2243 = vmatprep.mubr.f32.mxu0 0.0
        %v2244 = vand.u32 %v339, 4294901760
        %2245 = vmatmul.mubr.f32.gmra.mrb[0].mxu0 %v2244
        %v2246 = vpop.f32.mrb[0].mxu0
        %v2247 = vadd.f32 %v1974, %v2246
        %v2248 = vpop.f32.mrb[0].mxu0
        %2249 = vmatprep.mubr.f32.mxu0 0.0
        %v2250 = vand.u32 %v340, 4294901760
        %2251 = vmatmul.mubr.f32.gmra.mrb[0].mxu0 %v2250
        %v2252 = vpop.f32.mrb[0].mxu0
        %v2253 = vadd.f32 %v1980, %v2252
        %v2254 = vpop.f32.mrb[0].mxu0
        %2255 = vmatprep.mubr.f32.mxu0 0.0
        %v2256 = vand.u32 %v341, 4294901760
        %2257 = vmatmul.mubr.f32.gmra.mrb[0].mxu0 %v2256
        %v2258 = vpop.f32.mrb[0].mxu0
        %v2259 = vadd.f32 %v1986, %v2258
        %v2260 = vpop.f32.mrb[0].mxu0
        %2261 = vmatprep.mubr.f32.mxu0 0.0
        %v2262 = vand.u32 %v342, 4294901760
        %2263 = vmatmul.mubr.f32.gmra.mrb[0].mxu0 %v2262
        %v2264 = vpop.f32.mrb[0].mxu0
        %v2265 = vadd.f32 %v1992, %v2264
        %v2266 = vpop.f32.mrb[0].mxu0
        %2267 = vmatprep.mubr.f32.mxu0 0.0
        %v2268 = vand.u32 %v343, 4294901760
        %2269 = vmatmul.mubr.f32.gmra.mrb[0].mxu0 %v2268
        %v2270 = vpop.f32.mrb[0].mxu0
        %v2271 = vadd.f32 %v1998, %v2270
        %v2272 = vpop.f32.mrb[0].mxu0
        %2273 = vmatprep.mubr.f32.mxu0 0.0
        %v2274 = vand.u32 %v344, 4294901760
        %2275 = vmatmul.mubr.f32.gmra.mrb[0].mxu0 %v2274
        %v2276 = vpop.f32.mrb[0].mxu0
        %v2277 = vadd.f32 %v2004, %v2276
        %v2278 = vpop.f32.mrb[0].mxu0
        %2279 = vmatprep.mubr.f32.mxu0 0.0
        %v2280 = vand.u32 %v345, 4294901760
        %2281 = vmatmul.mubr.f32.gmra.mrb[0].mxu0 %v2280
        %v2282 = vpop.f32.mrb[0].mxu0
        %v2283 = vadd.f32 %v2010, %v2282
        %v2284 = vpop.f32.mrb[0].mxu0
        %2285 = vmatprep.mubr.f32.mxu0 0.0
        %v2286 = vand.u32 %v346, 4294901760
        %2287 = vmatmul.mubr.f32.gmra.mrb[0].mxu0 %v2286
        %v2288 = vpop.f32.mrb[0].mxu0
        %v2289 = vadd.f32 %v2016, %v2288
        %v2290 = vpop.f32.mrb[0].mxu0
        %2291 = vmatprep.mubr.f32.mxu0 0.0
        %v2292 = vand.u32 %v347, 4294901760
        %2293 = vmatmul.mubr.f32.gmra.mrb[0].mxu0 %v2292
        %v2294 = vpop.f32.mrb[0].mxu0
        %v2295 = vadd.f32 %v2022, %v2294
        %v2296 = vpop.f32.mrb[0].mxu0
        %2297 = vmatprep.mubr.f32.mxu0 0.0
        %v2298 = vand.u32 %v348, 4294901760
        %2299 = vmatmul.mubr.f32.gmra.mrb[0].mxu0 %v2298
        %v2300 = vpop.f32.mrb[0].mxu0
        %v2301 = vadd.f32 %v2028, %v2300
        %v2302 = vpop.f32.mrb[0].mxu0
        %2303 = vmatprep.mubr.f32.mxu0 0.0
        %v2304 = vand.u32 %v349, 4294901760
        %2305 = vmatmul.mubr.f32.gmra.mrb[0].mxu0 %v2304
        %v2306 = vpop.f32.mrb[0].mxu0
        %v2307 = vadd.f32 %v2034, %v2306
        %v2308 = vpop.f32.mrb[0].mxu0
        %2309 = vmatprep.mubr.f32.mxu0 0.0
        %v2310 = vand.u32 %v350, 4294901760
        %2311 = vmatmul.mubr.f32.gmra.mrb[0].mxu0 %v2310
        %v2312 = vpop.f32.mrb[0].mxu0
        %v2313 = vadd.f32 %v2040, %v2312
        %v2314 = vpop.f32.mrb[0].mxu0
        %2315 = vmatprep.mubr.f32.mxu0 0.0
        %v2316 = vand.u32 %v351, 4294901760
        %2317 = vmatmul.mubr.f32.gmra.mrb[0].mxu0 %v2316
        %v2318 = vpop.f32.mrb[0].mxu0
        %v2319 = vadd.f32 %v2046, %v2318
        %v2320 = vpop.f32.mrb[0].mxu0
        %2321 = vmatprep.mubr.f32.mxu0 0.0
        %v2322 = vand.u32 %v352, 4294901760
        %2323 = vmatmul.mubr.f32.gmra.mrb[0].mxu0 %v2322
        %v2324 = vpop.f32.mrb[0].mxu0
        %v2325 = vadd.f32 %v2052, %v2324
        %v2326 = vpop.f32.mrb[0].mxu0
        %2327 = vmatprep.mubr.f32.mxu0 0.0
        %v2328 = vand.u32 %v353, 4294901760
        %2329 = vmatmul.mubr.f32.gmra.mrb[0].mxu0 %v2328
        %v2330 = vpop.f32.mrb[0].mxu0
        %v2331 = vadd.f32 %v2058, %v2330
        %v2332 = vpop.f32.mrb[0].mxu0
        %2333 = vmatprep.mubr.f32.mxu0 0.0
        %v2334 = vand.u32 %v354, 4294901760
        %2335 = vmatmul.mubr.f32.gmra.mrb[0].mxu0 %v2334
        %v2336 = vpop.f32.mrb[0].mxu0
        %v2337 = vadd.f32 %v2064, %v2336
        %v2338 = vpop.f32.mrb[0].mxu0
        %2339 = vmatprep.mubr.f32.mxu0 0.0
        %v2340 = vand.u32 %v355, 4294901760
        %2341 = vmatmul.mubr.f32.gmra.mrb[0].mxu0 %v2340
        %v2342 = vpop.f32.mrb[0].mxu0
        %v2343 = vadd.f32 %v2070, %v2342
        %v2344 = vpop.f32.mrb[0].mxu0
        %2345 = vdwg.mxu0
        %v2346 = vadd.f32 %v292, %v2157
        %v2347 = vadd.f32 %v293, %v2163
        %v2348 = vadd.f32 %v294, %v2169
        %v2349 = vadd.f32 %v295, %v2175
        %v2350 = vadd.f32 %v296, %v2181
        %v2351 = vadd.f32 %v297, %v2187
        %v2352 = vadd.f32 %v298, %v2193
        %v2353 = vadd.f32 %v299, %v2199
        %v2354 = vadd.f32 %v300, %v2205
        %v2355 = vadd.f32 %v301, %v2211
        %v2356 = vadd.f32 %v302, %v2217
        %v2357 = vadd.f32 %v303, %v2223
        %v2358 = vadd.f32 %v304, %v2229
        %v2359 = vadd.f32 %v305, %v2235
        %v2360 = vadd.f32 %v306, %v2241
        %v2361 = vadd.f32 %v307, %v2247
        %v2362 = vadd.f32 %v308, %v2253
        %v2363 = vadd.f32 %v309, %v2259
        %v2364 = vadd.f32 %v310, %v2265
        %v2365 = vadd.f32 %v311, %v2271
        %v2366 = vadd.f32 %v312, %v2277
        %v2367 = vadd.f32 %v313, %v2283
        %v2368 = vadd.f32 %v314, %v2289
        %v2369 = vadd.f32 %v315, %v2295
        %v2370 = vadd.f32 %v316, %v2301
        %v2371 = vadd.f32 %v317, %v2307
        %v2372 = vadd.f32 %v318, %v2313
        %v2373 = vadd.f32 %v319, %v2319
        %v2374 = vadd.f32 %v320, %v2325
        %v2375 = vadd.f32 %v321, %v2331
        %v2376 = vadd.f32 %v322, %v2337
        %v2377 = vadd.f32 %v323, %v2343
        %2378 = vst [vmem:[#allocation2] sm:$0xff] %v2346
        %2379 = vst [vmem:[#allocation2 + $0x8] sm:$0xff] %v2347
        %2380 = vst [vmem:[#allocation2 + $0x10] sm:$0xff] %v2348
        %2381 = vst [vmem:[#allocation2 + $0x18] sm:$0xff] %v2349
        %2382 = vst [vmem:[#allocation2 + $0x20] sm:$0xff] %v2350
        %2383 = vst [vmem:[#allocation2 + $0x28] sm:$0xff] %v2351
        %2384 = vst [vmem:[#allocation2 + $0x30] sm:$0xff] %v2352
        %2385 = vst [vmem:[#allocation2 + $0x38] sm:$0xff] %v2353
        %2386 = vst [vmem:[#allocation2 + $0x40] sm:$0xff] %v2354
        %2387 = vst [vmem:[#allocation2 + $0x48] sm:$0xff] %v2355
        %2388 = vst [vmem:[#allocation2 + $0x50] sm:$0xff] %v2356
        %2389 = vst [vmem:[#allocation2 + $0x58] sm:$0xff] %v2357
        %2390 = vst [vmem:[#allocation2 + $0x60] sm:$0xff] %v2358
        %2391 = vst [vmem:[#allocation2 + $0x68] sm:$0xff] %v2359
        %2392 = vst [vmem:[#allocation2 + $0x70] sm:$0xff] %v2360
        %2393 = vst [vmem:[#allocation2 + $0x78] sm:$0xff] %v2361
        %2394 = vst [vmem:[#allocation2 + $0x80] sm:$0xff] %v2362
        %2395 = vst [vmem:[#allocation2 + $0x88] sm:$0xff] %v2363
        %2396 = vst [vmem:[#allocation2 + $0x90] sm:$0xff] %v2364
        %2397 = vst [vmem:[#allocation2 + $0x98] sm:$0xff] %v2365
        %2398 = vst [vmem:[#allocation2 + $0xa0] sm:$0xff] %v2366
        %2399 = vst [vmem:[#allocation2 + $0xa8] sm:$0xff] %v2367
        %2400 = vst [vmem:[#allocation2 + $0xb0] sm:$0xff] %v2368
        %2401 = vst [vmem:[#allocation2 + $0xb8] sm:$0xff] %v2369
        %2402 = vst [vmem:[#allocation2 + $0xc0] sm:$0xff] %v2370
        %2403 = vst [vmem:[#allocation2 + $0xc8] sm:$0xff] %v2371
        %2404 = vst [vmem:[#allocation2 + $0xd0] sm:$0xff] %v2372
        %2405 = vst [vmem:[#allocation2 + $0xd8] sm:$0xff] %v2373
        %2406 = vst [vmem:[#allocation2 + $0xe0] sm:$0xff] %v2374
        %2407 = vst [vmem:[#allocation2 + $0xe8] sm:$0xff] %v2375
        %2408 = vst [vmem:[#allocation2 + $0xf0] sm:$0xff] %v2376
        %2409 = vst [vmem:[#allocation2 + $0xf8] sm:$0xff] %v2377
        // Predicated region
        $region45: #{tpu_custom_call.1} parent=31 // pred_check
          %p2410 = pneg %p256
        $region46: #{tpu_custom_call.1} parent=31 // pred_check_branch
          %2412 = sbr.rel (%p2410) target = $region48
        $region47: #{tpu_custom_call.1} parent=31 // pred_region
          %v2413 = vld [vmem:[#allocation2] sm:$0xff]
          %v2414 = vld [vmem:[#allocation2 + $0x8] sm:$0xff]
          %v2415 = vld [vmem:[#allocation2 + $0x10] sm:$0xff]
          %v2416 = vld [vmem:[#allocation2 + $0x18] sm:$0xff]
          %v2417 = vld [vmem:[#allocation2 + $0x20] sm:$0xff]
          %v2418 = vld [vmem:[#allocation2 + $0x28] sm:$0xff]
          %v2419 = vld [vmem:[#allocation2 + $0x30] sm:$0xff]
          %v2420 = vld [vmem:[#allocation2 + $0x38] sm:$0xff]
          %v2421 = vld [vmem:[#allocation2 + $0x40] sm:$0xff]
          %v2422 = vld [vmem:[#allocation2 + $0x48] sm:$0xff]
          %v2423 = vld [vmem:[#allocation2 + $0x50] sm:$0xff]
          %v2424 = vld [vmem:[#allocation2 + $0x58] sm:$0xff]
          %v2425 = vld [vmem:[#allocation2 + $0x60] sm:$0xff]
          %v2426 = vld [vmem:[#allocation2 + $0x68] sm:$0xff]
          %v2427 = vld [vmem:[#allocation2 + $0x70] sm:$0xff]
          %v2428 = vld [vmem:[#allocation2 + $0x78] sm:$0xff]
          %v2429 = vld [vmem:[#allocation2 + $0x80] sm:$0xff]
          %v2430 = vld [vmem:[#allocation2 + $0x88] sm:$0xff]
          %v2431 = vld [vmem:[#allocation2 + $0x90] sm:$0xff]
          %v2432 = vld [vmem:[#allocation2 + $0x98] sm:$0xff]
          %v2433 = vld [vmem:[#allocation2 + $0xa0] sm:$0xff]
          %v2434 = vld [vmem:[#allocation2 + $0xa8] sm:$0xff]
          %v2435 = vld [vmem:[#allocation2 + $0xb0] sm:$0xff]
          %v2436 = vld [vmem:[#allocation2 + $0xb8] sm:$0xff]
          %v2437 = vld [vmem:[#allocation2 + $0xc0] sm:$0xff]
          %v2438 = vld [vmem:[#allocation2 + $0xc8] sm:$0xff]
          %v2439 = vld [vmem:[#allocation2 + $0xd0] sm:$0xff]
          %v2440 = vld [vmem:[#allocation2 + $0xd8] sm:$0xff]
          %v2441 = vld [vmem:[#allocation2 + $0xe0] sm:$0xff]
          %v2442 = vld [vmem:[#allocation2 + $0xe8] sm:$0xff]
          %v2443 = vld [vmem:[#allocation2 + $0xf0] sm:$0xff]
          %v2444 = vld [vmem:[#allocation2 + $0xf8] sm:$0xff]
          %v2445 = vld [vmem:[%s254] sm:$0x1]
          %v2447 = vlaneseq
          %v2448 = vshrl.u32 %v2447, 7
          %v2449 = vsub.s32 0, %v2448
          %v2450 = vrot.slane %v2445, %v2449
          %v2452 = vadd.f32 %v2413, %v2450
          %v2453 = vadd.f32 %v2414, %v2450
          %v2454 = vadd.f32 %v2415, %v2450
          %v2455 = vadd.f32 %v2416, %v2450
          %v2456 = vadd.f32 %v2417, %v2450
          %v2457 = vadd.f32 %v2418, %v2450
          %v2458 = vadd.f32 %v2419, %v2450
          %v2459 = vadd.f32 %v2420, %v2450
          %v2460 = vadd.f32 %v2421, %v2450
          %v2461 = vadd.f32 %v2422, %v2450
          %v2462 = vadd.f32 %v2423, %v2450
          %v2463 = vadd.f32 %v2424, %v2450
          %v2464 = vadd.f32 %v2425, %v2450
          %v2465 = vadd.f32 %v2426, %v2450
          %v2466 = vadd.f32 %v2427, %v2450
          %v2467 = vadd.f32 %v2428, %v2450
          %v2468 = vadd.f32 %v2429, %v2450
          %v2469 = vadd.f32 %v2430, %v2450
          %v2470 = vadd.f32 %v2431, %v2450
          %v2471 = vadd.f32 %v2432, %v2450
          %v2472 = vadd.f32 %v2433, %v2450
          %v2473 = vadd.f32 %v2434, %v2450
          %v2474 = vadd.f32 %v2435, %v2450
          %v2475 = vadd.f32 %v2436, %v2450
          %v2476 = vadd.f32 %v2437, %v2450
          %v2477 = vadd.f32 %v2438, %v2450
          %v2478 = vadd.f32 %v2439, %v2450
          %v2479 = vadd.f32 %v2440, %v2450
          %v2480 = vadd.f32 %v2441, %v2450
          %v2481 = vadd.f32 %v2442, %v2450
          %v2482 = vadd.f32 %v2443, %v2450
          %v2483 = vadd.f32 %v2444, %v2450
          %v2484 = vsub.f32 0.0, %v2452
          %v2485 = vsub.f32 0.0, %v2453
          %v2486 = vsub.f32 0.0, %v2454
          %v2487 = vsub.f32 0.0, %v2455
          %v2488 = vsub.f32 0.0, %v2456
          %v2489 = vsub.f32 0.0, %v2457
          %v2490 = vsub.f32 0.0, %v2458
          %v2491 = vsub.f32 0.0, %v2459
          %v2492 = vsub.f32 0.0, %v2460
          %v2493 = vsub.f32 0.0, %v2461
          %v2494 = vsub.f32 0.0, %v2462
          %v2495 = vsub.f32 0.0, %v2463
          %v2496 = vsub.f32 0.0, %v2464
          %v2497 = vsub.f32 0.0, %v2465
          %v2498 = vsub.f32 0.0, %v2466
          %v2499 = vsub.f32 0.0, %v2467
          %v2500 = vsub.f32 0.0, %v2468
          %v2501 = vsub.f32 0.0, %v2469
          %v2502 = vsub.f32 0.0, %v2470
          %v2503 = vsub.f32 0.0, %v2471
          %v2504 = vsub.f32 0.0, %v2472
          %v2505 = vsub.f32 0.0, %v2473
          %v2506 = vsub.f32 0.0, %v2474
          %v2507 = vsub.f32 0.0, %v2475
          %v2508 = vsub.f32 0.0, %v2476
          %v2509 = vsub.f32 0.0, %v2477
          %v2510 = vsub.f32 0.0, %v2478
          %v2511 = vsub.f32 0.0, %v2479
          %v2512 = vsub.f32 0.0, %v2480
          %v2513 = vsub.f32 0.0, %v2481
          %v2514 = vsub.f32 0.0, %v2482
          %v2515 = vsub.f32 0.0, %v2483
          %v2516 = vmul.f32 %v2484, 1.442695
          %v2517 = vpow.pop %v2516
          %v2518 = vmul.f32 %v2485, 1.442695
          %v2519 = vpow.pop %v2518
          %v2520 = vmul.f32 %v2486, 1.442695
          %v2521 = vpow.pop %v2520
          %v2522 = vmul.f32 %v2487, 1.442695
          %v2523 = vpow.pop %v2522
          %v2524 = vmul.f32 %v2488, 1.442695
          %v2525 = vpow.pop %v2524
          %v2526 = vmul.f32 %v2489, 1.442695
          %v2527 = vpow.pop %v2526
          %v2528 = vmul.f32 %v2490, 1.442695
          %v2529 = vpow.pop %v2528
          %v2530 = vmul.f32 %v2491, 1.442695
          %v2531 = vpow.pop %v2530
          %v2532 = vmul.f32 %v2492, 1.442695
          %v2533 = vpow.pop %v2532
          %v2534 = vmul.f32 %v2493, 1.442695
          %v2535 = vpow.pop %v2534
          %v2536 = vmul.f32 %v2494, 1.442695
          %v2537 = vpow.pop %v2536
          %v2538 = vmul.f32 %v2495, 1.442695
          %v2539 = vpow.pop %v2538
          %v2540 = vmul.f32 %v2496, 1.442695
          %v2541 = vpow.pop %v2540
          %v2542 = vmul.f32 %v2497, 1.442695
          %v2543 = vpow.pop %v2542
          %v2544 = vmul.f32 %v2498, 1.442695
          %v2545 = vpow.pop %v2544
          %v2546 = vmul.f32 %v2499, 1.442695
          %v2547 = vpow.pop %v2546
          %v2548 = vmul.f32 %v2500, 1.442695
          %v2549 = vpow.pop %v2548
          %v2550 = vmul.f32 %v2501, 1.442695
          %v2551 = vpow.pop %v2550
          %v2552 = vmul.f32 %v2502, 1.442695
          %v2553 = vpow.pop %v2552
          %v2554 = vmul.f32 %v2503, 1.442695
          %v2555 = vpow.pop %v2554
          %v2556 = vmul.f32 %v2504, 1.442695
          %v2557 = vpow.pop %v2556
          %v2558 = vmul.f32 %v2505, 1.442695
          %v2559 = vpow.pop %v2558
          %v2560 = vmul.f32 %v2506, 1.442695
          %v2561 = vpow.pop %v2560
          %v2562 = vmul.f32 %v2507, 1.442695
          %v2563 = vpow.pop %v2562
          %v2564 = vmul.f32 %v2508, 1.442695
          %v2565 = vpow.pop %v2564
          %v2566 = vmul.f32 %v2509, 1.442695
          %v2567 = vpow.pop %v2566
          %v2568 = vmul.f32 %v2510, 1.442695
          %v2569 = vpow.pop %v2568
          %v2570 = vmul.f32 %v2511, 1.442695
          %v2571 = vpow.pop %v2570
          %v2572 = vmul.f32 %v2512, 1.442695
          %v2573 = vpow.pop %v2572
          %v2574 = vmul.f32 %v2513, 1.442695
          %v2575 = vpow.pop %v2574
          %v2576 = vmul.f32 %v2514, 1.442695
          %v2577 = vpow.pop %v2576
          %v2578 = vmul.f32 %v2515, 1.442695
          %v2579 = vpow.pop %v2578
          %v2580 = vadd.f32 %v2517, 1.0
          %v2581 = vadd.f32 %v2519, 1.0
          %v2582 = vadd.f32 %v2521, 1.0
          %v2583 = vadd.f32 %v2523, 1.0
          %v2584 = vadd.f32 %v2525, 1.0
          %v2585 = vadd.f32 %v2527, 1.0
          %v2586 = vadd.f32 %v2529, 1.0
          %v2587 = vadd.f32 %v2531, 1.0
          %v2588 = vadd.f32 %v2533, 1.0
          %v2589 = vadd.f32 %v2535, 1.0
          %v2590 = vadd.f32 %v2537, 1.0
          %v2591 = vadd.f32 %v2539, 1.0
          %v2592 = vadd.f32 %v2541, 1.0
          %v2593 = vadd.f32 %v2543, 1.0
          %v2594 = vadd.f32 %v2545, 1.0
          %v2595 = vadd.f32 %v2547, 1.0
          %v2596 = vadd.f32 %v2549, 1.0
          %v2597 = vadd.f32 %v2551, 1.0
          %v2598 = vadd.f32 %v2553, 1.0
          %v2599 = vadd.f32 %v2555, 1.0
          %v2600 = vadd.f32 %v2557, 1.0
          %v2601 = vadd.f32 %v2559, 1.0
          %v2602 = vadd.f32 %v2561, 1.0
          %v2603 = vadd.f32 %v2563, 1.0
          %v2604 = vadd.f32 %v2565, 1.0
          %v2605 = vadd.f32 %v2567, 1.0
          %v2606 = vadd.f32 %v2569, 1.0
          %v2607 = vadd.f32 %v2571, 1.0
          %v2608 = vadd.f32 %v2573, 1.0
          %v2609 = vadd.f32 %v2575, 1.0
          %v2610 = vadd.f32 %v2577, 1.0
          %v2611 = vadd.f32 %v2579, 1.0
          %v2612 = vrcp.pop %v2580
          %v2613 = vrcp.pop %v2581
          %v2614 = vrcp.pop %v2582
          %v2615 = vrcp.pop %v2583
          %v2616 = vrcp.pop %v2584
          %v2617 = vrcp.pop %v2585
          %v2618 = vrcp.pop %v2586
          %v2619 = vrcp.pop %v2587
          %v2620 = vrcp.pop %v2588
          %v2621 = vrcp.pop %v2589
          %v2622 = vrcp.pop %v2590
          %v2623 = vrcp.pop %v2591
          %v2624 = vrcp.pop %v2592
          %v2625 = vrcp.pop %v2593
          %v2626 = vrcp.pop %v2594
          %v2627 = vrcp.pop %v2595
          %v2628 = vrcp.pop %v2596
          %v2629 = vrcp.pop %v2597
          %v2630 = vrcp.pop %v2598
          %v2631 = vrcp.pop %v2599
          %v2632 = vrcp.pop %v2600
          %v2633 = vrcp.pop %v2601
          %v2634 = vrcp.pop %v2602
          %v2635 = vrcp.pop %v2603
          %v2636 = vrcp.pop %v2604
          %v2637 = vrcp.pop %v2605
          %v2638 = vrcp.pop %v2606
          %v2639 = vrcp.pop %v2607
          %v2640 = vrcp.pop %v2608
          %v2641 = vrcp.pop %v2609
          %v2642 = vrcp.pop %v2610
          %v2643 = vrcp.pop %v2611
          %v2644 = vmul.f32 %v2452, %v2612
          %v2645 = vmul.f32 %v2453, %v2613
          %v2646 = vmul.f32 %v2454, %v2614
          %v2647 = vmul.f32 %v2455, %v2615
          %v2648 = vmul.f32 %v2456, %v2616
          %v2649 = vmul.f32 %v2457, %v2617
          %v2650 = vmul.f32 %v2458, %v2618
          %v2651 = vmul.f32 %v2459, %v2619
          %v2652 = vmul.f32 %v2460, %v2620
          %v2653 = vmul.f32 %v2461, %v2621
          %v2654 = vmul.f32 %v2462, %v2622
          %v2655 = vmul.f32 %v2463, %v2623
          %v2656 = vmul.f32 %v2464, %v2624
          %v2657 = vmul.f32 %v2465, %v2625
          %v2658 = vmul.f32 %v2466, %v2626
          %v2659 = vmul.f32 %v2467, %v2627
          %v2660 = vmul.f32 %v2468, %v2628
          %v2661 = vmul.f32 %v2469, %v2629
          %v2662 = vmul.f32 %v2470, %v2630
          %v2663 = vmul.f32 %v2471, %v2631
          %v2664 = vmul.f32 %v2472, %v2632
          %v2665 = vmul.f32 %v2473, %v2633
          %v2666 = vmul.f32 %v2474, %v2634
          %v2667 = vmul.f32 %v2475, %v2635
          %v2668 = vmul.f32 %v2476, %v2636
          %v2669 = vmul.f32 %v2477, %v2637
          %v2670 = vmul.f32 %v2478, %v2638
          %v2671 = vmul.f32 %v2479, %v2639
          %v2672 = vmul.f32 %v2480, %v2640
          %v2673 = vmul.f32 %v2481, %v2641
          %v2674 = vmul.f32 %v2482, %v2642
          %v2675 = vmul.f32 %v2483, %v2643
          %2676 = vst [vmem:[%s249] sm:$0xff] %v2644
          %2677 = vst [vmem:[%s249 + $0x8] sm:$0xff] %v2645
          %2678 = vst [vmem:[%s249 + $0x10] sm:$0xff] %v2646
          %2679 = vst [vmem:[%s249 + $0x18] sm:$0xff] %v2647
          %2680 = vst [vmem:[%s249 + $0x20] sm:$0xff] %v2648
          %2681 = vst [vmem:[%s249 + $0x28] sm:$0xff] %v2649
          %2682 = vst [vmem:[%s249 + $0x30] sm:$0xff] %v2650
          %2683 = vst [vmem:[%s249 + $0x38] sm:$0xff] %v2651
          %2684 = vst [vmem:[%s249 + $0x40] sm:$0xff] %v2652
          %2685 = vst [vmem:[%s249 + $0x48] sm:$0xff] %v2653
          %2686 = vst [vmem:[%s249 + $0x50] sm:$0xff] %v2654
          %2687 = vst [vmem:[%s249 + $0x58] sm:$0xff] %v2655
          %2688 = vst [vmem:[%s249 + $0x60] sm:$0xff] %v2656
          %2689 = vst [vmem:[%s249 + $0x68] sm:$0xff] %v2657
          %2690 = vst [vmem:[%s249 + $0x70] sm:$0xff] %v2658
          %2691 = vst [vmem:[%s249 + $0x78] sm:$0xff] %v2659
          %2692 = vst [vmem:[%s249 + $0x80] sm:$0xff] %v2660
          %2693 = vst [vmem:[%s249 + $0x88] sm:$0xff] %v2661
          %2694 = vst [vmem:[%s249 + $0x90] sm:$0xff] %v2662
          %2695 = vst [vmem:[%s249 + $0x98] sm:$0xff] %v2663
          %2696 = vst [vmem:[%s249 + $0xa0] sm:$0xff] %v2664
          %2697 = vst [vmem:[%s249 + $0xa8] sm:$0xff] %v2665
          %2698 = vst [vmem:[%s249 + $0xb0] sm:$0xff] %v2666
          %2699 = vst [vmem:[%s249 + $0xb8] sm:$0xff] %v2667
          %2700 = vst [vmem:[%s249 + $0xc0] sm:$0xff] %v2668
          %2701 = vst [vmem:[%s249 + $0xc8] sm:$0xff] %v2669
          %2702 = vst [vmem:[%s249 + $0xd0] sm:$0xff] %v2670
          %2703 = vst [vmem:[%s249 + $0xd8] sm:$0xff] %v2671
          %2704 = vst [vmem:[%s249 + $0xe0] sm:$0xff] %v2672
          %2705 = vst [vmem:[%s249 + $0xe8] sm:$0xff] %v2673
          %2706 = vst [vmem:[%s249 + $0xf0] sm:$0xff] %v2674
          %2707 = vst [vmem:[%s249 + $0xf8] sm:$0xff] %v2675
        $region48: #{tpu_custom_call.1} parent=31 // pred_fallthru
          _
        %s2708 = sand.u32 %s132, 1
        %s2709 = scalar_lea.sflag [#allocation5], %s2708
        %s2710 = sand.u32 %s132, 1
        %s2711 = smul.addr %s2710, 256
        %s2712 = scalar_lea.vmem [#allocation8], %s2711
        // Predicated region
        $region49: #{tpu_custom_call.1} parent=31 // pred_check
          %p2713 = pneg %p142
        $region50: #{tpu_custom_call.1} parent=31 // pred_check_branch
          %2715 = sbr.rel (%p2713) target = $region52
        $region51: #{tpu_custom_call.1} parent=31 // pred_region
          %s2716 = smul.u32 32, %s26
          %s2718 = ssub.s32 4096, 4096
          %2719 = vsyncadd %s2709, %s2718
          %s2720 = sadd.s32 %s27, %s2716
          %s2721 = smul.addr %s2720, 128
          %s2722 = scalar_lea.hbm %s3, %s2721
          %s2723 = sshll.u32 %s2712, 4
          %s2724 = int_to_ptr.vmem [resolvable:$true] %s2723
          %2729 = dma.vmem_to_hbm [thread:$0]  %s2724, 4096, %s2722, %s2709, 128, 128, 8
        $region52: #{tpu_custom_call.1} parent=31 // pred_fallthru
          _
      $region32: #{tpu_custom_call.1} parent=5 // pred_fallthru
        _
      %p2730 = scmp.le.s32.totalorder 2, %s16
      // Predicated region
      $region53: #{tpu_custom_call.1} parent=5 // pred_check
        %p2731 = pneg %p2730
      $region54: #{tpu_custom_call.1} parent=5 // pred_check_branch
        %2733 = sbr.rel (%p2731) target = $region56
      $region55: #{tpu_custom_call.1} parent=5 // pred_region
        %s2734 = ssub.s32 %s16, 2
        // Predicated region
        $region57: #{tpu_custom_call.1} parent=55 // pred_check
          %p2735 = pneg %p148
        $region58: #{tpu_custom_call.1} parent=55 // pred_check_branch
          %2737 = sbr.rel (%p2735) target = $region60
        $region59: #{tpu_custom_call.1} parent=55 // pred_region
          %s2738 = sand.u32 %s133, 1
          %s2739 = scalar_lea.sflag [#allocation5], %s2738
          %s2740 = sand.u32 %s133, 1
          %s2741 = smul.addr %s2740, 256
          %s2742 = scalar_lea.vmem [#allocation8], %s2741
          %2743 = dma.done %s2739, 4096
        $region60: #{tpu_custom_call.1} parent=55 // pred_fallthru
          _
      $region56: #{tpu_custom_call.1} parent=5 // pred_fallthru
        _
    $region6: #{tpu_custom_call.1} parent=1 // loop_footer
      %s20 = sadd.s32 1, %s16
    $region7: #{tpu_custom_call.1} parent=1 // loop_footer_branch
      %15 = sbr.rel target = $region3
    $region8: #{tpu_custom_call.1} parent=1 // loop_exit
      _
    %2744 = vsyncpa [#allocation4], 1
    %s2745 = scalar_lea.sflag [#allocation4], 1
    %2746 = vsyncpa %s2745, 1
    %2747 = vsyncpa [#allocation7], 1
    %2748 = vsyncpa [#allocation5], 1
    %s2749 = scalar_lea.sflag [#allocation5], 1
    %2750 = vsyncpa %s2749, 1

</llo_original>
